<compile_context>
chip_gen: v7x
topology: tpu7x:2x2x1
jax: 0.10.0
libtpu: 0.0.40
codegen_flags: <defaults>
</compile_context>

<pallas_src>
import math

import jax
import jax.numpy as jnp
from jax import lax
from jax.experimental import pallas as pl
from jax.experimental.pallas import tpu as pltpu


def _round_up(x, m):
    return ((x + m - 1) // m) * m


# ---------------------------------------------------------------------------
# Primary path: in-place windowed masking.
# ---------------------------------------------------------------------------
def _window_mask_kernel(pos_ref, len_ref, spec_ref, out_ref, buf, sems):
    """One row-group (RB batch rows) per grid step.

    pos_ref, len_ref : (B, num_mask) int32 in SMEM (scalar reads, resident).
    spec_ref, out_ref: (B*L, F) in HBM (pl.ANY); aliased to the same buffer
                       (or to XLA's protective copy if spec is not donated).
    buf              : (RB, num_mask, win, F) VMEM window staging.
    sems             : (RB, num_mask) DMA semaphores.
    """
    RB, num_mask, win, F = buf.shape
    B = pos_ref.shape[0]
    L = spec_ref.shape[0] // B
    row0 = pl.program_id(0) * RB

    def window(r, m):
        row = row0 + r
        # Clamp the static-size window into [0, L); the interval [pos, pos+len)
        # always fits because len < win <= L and pos + len <= L.
        ws = jnp.minimum(pos_ref[row, m], L - win)
        return row, ws

    # 1) Start all window loads first so their HBM latencies overlap.
    for r in range(RB):
        for m in range(num_mask):
            row, ws = window(r, m)
            pltpu.make_async_copy(spec_ref.at[pl.ds(row * L + ws, win), :],
                                  buf.at[r, m], sems.at[r, m]).start()

    # 2) Wait + zero the masked rows.  Applying the UNION of this row's mask
    #    intervals makes overlapping windows write identical bytes.
    for r in range(RB):
        for m in range(num_mask):
            row, ws = window(r, m)
            pltpu.make_async_copy(spec_ref.at[pl.ds(row * L + ws, win), :],
                                  buf.at[r, m], sems.at[r, m]).wait()
            t = ws + lax.broadcasted_iota(jnp.int32, (win, 1), 0)   # abs time idx
            drop = jnp.zeros((win, 1), dtype=jnp.bool_)
            for mm in range(num_mask):
                p = pos_ref[row, mm]
                e = p + len_ref[row, mm]
                drop = drop | ((p <= t) & (t < e))
            x = buf[r, m]
            buf[r, m] = jnp.where(drop, jnp.zeros((), x.dtype), x)

    # 3) Start all writebacks, then wait them all.
    for r in range(RB):
        for m in range(num_mask):
            row, ws = window(r, m)
            pltpu.make_async_copy(buf.at[r, m],
                                  out_ref.at[pl.ds(row * L + ws, win), :],
                                  sems.at[r, m]).start()
    for r in range(RB):
        for m in range(num_mask):
            row, ws = window(r, m)
            pltpu.make_async_copy(buf.at[r, m],
                                  out_ref.at[pl.ds(row * L + ws, win), :],
                                  sems.at[r, m]).wait()


def _mask_time_windows_inplace(spec, mask_pos, mask_len, *, num_mask, win,
                               row_block=None):
    B, L, F = spec.shape
    itemsize = jnp.dtype(spec.dtype).itemsize

    # Row-group size: window DMAs of a group are batched so their latencies
    # overlap.  Keep the staging buffer small, keep several grid steps when B
    # permits (so both v7x TensorCores get work), and use an exact divisor of B
    # so no semaphore is conditionally signalled/waited.
    win_bytes = max(1, num_mask * win * F * itemsize)
    rb_cap = max(1, min(16, (8 << 20) // win_bytes))
    if B >= 8:
        rb_cap = min(rb_cap, max(2, B // 4))    # >=4 grid steps on large batches
    rb_cap = min(rb_cap, B)
    if row_block is None:
        rb = 1
        for d in range(1, int(rb_cap) + 1):
            if B % d == 0:
                rb = d
    else:
        rb = int(row_block)
        assert B % rb == 0, "row_block must divide B"
    grid = (B // rb,)

    buf_bytes = rb * win_bytes
    vmem_limit = int(min(max(4 * buf_bytes, 16 << 20), 48 << 20))

    pos = mask_pos.astype(jnp.int32).reshape(B, num_mask)
    lens = mask_len.astype(jnp.int32).reshape(B, num_mask)
    spec2 = spec.reshape(B * L, F)                       # free view, lane-dense

    out = pl.pallas_call(
        _window_mask_kernel,
        out_shape=jax.ShapeDtypeStruct((B * L, F), spec.dtype),
        grid_spec=pltpu.PrefetchScalarGridSpec(
            num_scalar_prefetch=0,
            grid=grid,
            in_specs=[
                pl.BlockSpec(memory_space=pltpu.MemorySpace.SMEM),   # mask_pos
                pl.BlockSpec(memory_space=pltpu.MemorySpace.SMEM),   # mask_len
                pl.BlockSpec(memory_space=pl.ANY),                   # spec (HBM)
            ],
            out_specs=pl.BlockSpec(memory_space=pl.ANY),
            scratch_shapes=[
                pltpu.VMEM((rb, num_mask, win, F), spec.dtype),
                pltpu.SemaphoreType.DMA((rb, num_mask)),
            ],
        ),
        # Output aliases the spectrogram: untouched regions keep their values
        # with zero extra HBM traffic.  Jit the caller with a donated `spec` to
        # make this truly in-place; otherwise XLA inserts one protective copy.
        input_output_aliases={2: 0},
        compiler_params=pltpu.CompilerParams(
            dimension_semantics=("parallel",),   # disjoint rows per grid step
            vmem_limit_bytes=vmem_limit,
        ),
        cost_estimate=pl.CostEstimate(
            flops=0, transcendentals=0,
            bytes_accessed=2 * B * num_mask * win * F * itemsize),
    )(pos, lens, spec2)
    return out.reshape(B, L, F)


# ---------------------------------------------------------------------------
# Fallback path: full read-modify-write (large mask fraction / no max_width).
# ---------------------------------------------------------------------------
def _full_mask_kernel(pos_ref, len_ref, spec_ref, out_ref):
    """Masks a (tb, L, F) slab along the time dim; pos/len are (tb,1,num_mask)."""
    x = spec_ref[...]
    tb, L = x.shape[0], x.shape[1]
    pos = pos_ref[...]
    end = pos + len_ref[...]
    t = lax.broadcasted_iota(jnp.int32, (tb, L, 1), 1)
    drop = jnp.zeros((tb, L, 1), dtype=jnp.bool_)
    for m in range(pos.shape[-1]):                       # num_mask small, unrolled
        p = pos[:, :, m:m + 1]
        e = end[:, :, m:m + 1]
        drop = drop | ((p <= t) & (t < e))
    out_ref[...] = jnp.where(drop, jnp.zeros((), x.dtype), x)


def _mask_time_full(spec, mask_pos, mask_len, *, num_mask, batch_block=None,
                    target_bytes=4 << 20):
    B, L, F = spec.shape
    itemsize = jnp.dtype(spec.dtype).itemsize
    per_row = max(1, L * F * itemsize)
    tb = batch_block if batch_block is not None else max(1, target_bytes // per_row)
    tb = int(max(1, min(tb, B)))
    grid = (pl.cdiv(B, tb),)            # ragged last block handled by Pallas

    tile_bytes = tb * per_row
    # Always cover the double-buffered in+out working set; stay under v7x's
    # 64 MiB physical VMEM (v5e/v6e have 128 MiB).
    vmem_limit = int(min(max(4 * tile_bytes + (2 << 20), 32 << 20), 48 << 20))

    pos3 = mask_pos.astype(jnp.int32).reshape(B, 1, num_mask)
    len3 = mask_len.astype(jnp.int32).reshape(B, 1, num_mask)

    return pl.pallas_call(
        _full_mask_kernel,
        out_shape=jax.ShapeDtypeStruct((B, L, F), spec.dtype),
        grid_spec=pltpu.PrefetchScalarGridSpec(
            num_scalar_prefetch=0,
            grid=grid,
            in_specs=[
                pl.BlockSpec((tb, 1, num_mask), lambda gb: (gb, 0, 0)),
                pl.BlockSpec((tb, 1, num_mask), lambda gb: (gb, 0, 0)),
                pl.BlockSpec((tb, L, F), lambda gb: (gb, 0, 0)),
            ],
            out_specs=pl.BlockSpec((tb, L, F), lambda gb: (gb, 0, 0)),
        ),
        compiler_params=pltpu.CompilerParams(
            dimension_semantics=("parallel",),
            vmem_limit_bytes=vmem_limit,
        ),
        cost_estimate=pl.CostEstimate(
            flops=0, transcendentals=0,
            bytes_accessed=2 * B * L * F * itemsize),
    )(pos3, len3, spec)


def mask_along_time_pallas(spec, mask_pos, mask_len, *, num_mask, max_width=None,
                           force_full=False, batch_block=None):
    """Zero spec[b, pos:pos+len, :] for each of num_mask masks per batch row.

    spec: (B, L, F); mask_pos / mask_len: (B, num_mask) int32 with
    pos + len <= L.  `max_width` is a static upper bound (exclusive) on the
    mask lengths; when it is small vs. L the windowed in-place path is used,
    otherwise the full read-modify-write path.
    """
    B, L, F = spec.shape
    if not force_full and max_width is not None and max_width >= 1:
        win = min(L, _round_up(int(max_width), 8))
        if 2 * num_mask * win <= L:     # require >=2x less HBM traffic to switch
            return _mask_time_windows_inplace(spec, mask_pos, mask_len,
                                              num_mask=num_mask, win=win,
                                              row_block=batch_block)
    return _mask_time_full(spec, mask_pos, mask_len, num_mask=num_mask,
                           batch_block=batch_block)


# ---------------------------------------------------------------------------
# Module wrapper mirroring the PyTorch forward.
# ---------------------------------------------------------------------------
class MaskAlongAxisVariableMaxWidthPallas:
    """JAX/Pallas port of MaskAlongAxisVariableMaxWidth (dim='time', zero fill)."""

    def __init__(self, mask_width_ratio_range=(0.0, 0.05), num_mask=2,
                 dim="time", replace_with_zero=True):
        if isinstance(mask_width_ratio_range, float):
            mask_width_ratio_range = (0.0, mask_width_ratio_range)
        if len(mask_width_ratio_range) != 2:
            raise TypeError("mask_width_ratio_range must be (min_ratio, max_ratio)")
        if mask_width_ratio_range[1] < mask_width_ratio_range[0]:
            raise ValueError("mask_width_ratio_range must be (min_ratio, max_ratio)")
        if isinstance(dim, str):
            if dim == "time":
                dim = 1
            elif dim == "freq":
                dim = 2
            else:
                raise ValueError("dim must be int, 'time' or 'freq'")
        if dim != 1:
            # TODO(synk): dim='freq' would broadcast the mask over time instead.
            raise NotImplementedError("only dim='time' supported in this port")
        if replace_with_zero is not True:
            # TODO(synk): replace_with_zero=False (fill with spec.mean()) not implemented.
            raise NotImplementedError("only replace_with_zero=True supported")
        self.mask_width_ratio_range = mask_width_ratio_range
        self.num_mask = num_mask
        self.dim = dim
        self.mask_axis = "time"

    def _mask_widths(self, D):
        min_w = max(0, math.floor(D * self.mask_width_ratio_range[0]))
        max_w = min(D, math.floor(D * self.mask_width_ratio_range[1]))
        return min_w, max_w

    def _draw_masks(self, key, B, D):
        """Mirrors torch.randint draws (max exclusive) for widths and positions."""
        min_w, max_w = self._mask_widths(D)
        k1, k2 = jax.random.split(key)
        mask_len = jax.random.randint(
            k1, (B, self.num_mask), min_w, max_w, dtype=jnp.int32)
        max_pos = jnp.maximum(1, D - jnp.max(mask_len)).astype(jnp.int32)
        mask_pos = jax.random.randint(
            k2, (B, self.num_mask), 0, max_pos, dtype=jnp.int32)
        return mask_pos, mask_len

    def __call__(self, spec, spec_lengths=None, *, key):
        org_shape = spec.shape
        if spec.ndim == 4:
            spec = spec.reshape(-1, spec.shape[2], spec.shape[3])
        B, L, F = spec.shape

        D = spec.shape[self.dim]
        min_w, max_w = self._mask_widths(D)
        if max_w <= min_w:
            return spec.reshape(org_shape), spec_lengths

        mask_pos, mask_len = self._draw_masks(key, B, D)
        out = mask_along_time_pallas(spec, mask_pos, mask_len,
                                     num_mask=self.num_mask, max_width=max_w)
        return out.reshape(org_shape), spec_lengths


def _reference_jax(spec, mask_pos, mask_len):
    """Pure-JAX reference mirroring PyTorch mask_along_axis (dim=1, zero fill)."""
    B, L, F = spec.shape
    aran = jnp.arange(L)[None, None, :]                                    # (1,1,L)
    mask = (mask_pos[:, :, None] <= aran) & (aran < mask_pos[:, :, None] + mask_len[:, :, None])
    mask = jnp.any(mask, axis=1)[:, :, None]                               # (B,L,1)
    return jnp.where(mask, jnp.zeros((), spec.dtype), spec)


if __name__ == "__main__":
    key = jax.random.PRNGKey(0)
    k_spec, k_mask = jax.random.split(key)

    # (Batch, Length=time, Freq); floor(128*0.05)=6 > 0 so masking fires.
    B, L, F = 4, 128, 128
    spec = jax.random.normal(k_spec, (B, L, F), dtype=jnp.float32)
    spec_lengths = jnp.full((B,), L, dtype=jnp.int32)

    mod = MaskAlongAxisVariableMaxWidthPallas(
        mask_width_ratio_range=(0.0, 0.05), num_mask=2, dim="time",
        replace_with_zero=True)

    # Primary (windowed, in-place-style) path via the module call.
    out, out_lengths = mod(spec, spec_lengths, key=k_mask)
    out = jax.block_until_ready(out)

    # Re-derive the same random draws and compare with the pure-JAX reference.
    mask_pos, mask_len = mod._draw_masks(k_mask, B, L)
    ref = _reference_jax(spec, mask_pos, mask_len)

    assert out.shape == spec.shape and out.dtype == spec.dtype
    assert jnp.array_equal(out, ref), "windowed path mismatch vs reference"

    # Fallback full read-modify-write path, exercising a batch block that does
    # NOT divide B (ragged last grid block — previous correctness concern).
    out_full = mask_along_time_pallas(spec, mask_pos, mask_len, num_mask=2,
                                      force_full=True, batch_block=3)
    out_full = jax.block_until_ready(out_full)
    assert jnp.array_equal(out_full, ref), "full path mismatch vs reference"

    print("KERNEL_OK")
</pallas_src>

<mosaic_0001>
module attributes {stable_mosaic.version = 11 : i64} {
  func.func @_window_mask_kernel(%arg0: i32, %arg1: memref<4x2xi32, #tpu.memory_space<smem>>, %arg2: memref<4x2xi32, #tpu.memory_space<smem>>, %arg3: memref<512x128xf32, #tpu.memory_space<any>>, %arg4: memref<512x128xf32, #tpu.memory_space<any>>, %arg5: memref<4x2x8x128xf32, #tpu.memory_space<vmem>>, %arg6: memref<4x2x!tpu.dma_semaphore, #tpu.memory_space<semaphore_mem>>) attributes {dimension_semantics = [#tpu.dimension_semantics<parallel>], iteration_bounds = array<i64: 1>, scalar_prefetch = 0 : i64, scratch_operands = 2 : i64, tpu.core_type = #tpu.core_type<tc>, window_params = [{transform_indices = @transform_0, window_bounds = array<i64: 4, 2>}, {transform_indices = @transform_1, window_bounds = array<i64: 4, 2>}, {}, {}]} {
    %c4_i32 = arith.constant 4 : i32
    %0 = arith.muli %arg0, %c4_i32 : i32
    %c0_i32 = arith.constant 0 : i32
    %1 = arith.addi %0, %c0_i32 : i32
    %2 = arith.index_cast %1 : i32 to index
    %c0 = arith.constant 0 : index
    %3 = memref.load %arg1[%2, %c0] : memref<4x2xi32, #tpu.memory_space<smem>>
    %c120_i32 = arith.constant 120 : i32
    %4 = arith.minsi %3, %c120_i32 : i32
    %c128_i32 = arith.constant 128 : i32
    %5 = arith.muli %1, %c128_i32 : i32
    %6 = arith.addi %5, %4 : i32
    %c0_i32_0 = arith.constant 0 : i32
    %c0_i32_1 = arith.constant 0 : i32
    %c0_i32_2 = arith.constant 0 : i32
    %c0_i32_3 = arith.constant 0 : i32
    %c0_i32_4 = arith.constant 0 : i32
    %7 = tpu.memref_slice %arg3[%6, %c0_i32_4] : memref<512x128xf32, #tpu.memory_space<any>> -> memref<8x128xf32, #tpu.memory_space<any>>
    %c0_i32_5 = arith.constant 0 : i32
    %c0_i32_6 = arith.constant 0 : i32
    %8 = tpu.memref_slice %arg5[%c0_i32_0, %c0_i32_1, %c0_i32_5, %c0_i32_6] : memref<4x2x8x128xf32, #tpu.memory_space<vmem>> -> memref<1x1x8x128xf32, #tpu.memory_space<vmem>>
    %9 = tpu.memref_squeeze %8 : memref<1x1x8x128xf32, #tpu.memory_space<vmem>> -> memref<8x128xf32, #tpu.memory_space<vmem>>
    %10 = tpu.memref_slice %arg6[%c0_i32_2, %c0_i32_3] : memref<4x2x!tpu.dma_semaphore, #tpu.memory_space<semaphore_mem>> -> memref<1x1x!tpu.dma_semaphore, #tpu.memory_space<semaphore_mem>>
    %11 = tpu.memref_squeeze %10 : memref<1x1x!tpu.dma_semaphore, #tpu.memory_space<semaphore_mem>> -> memref<!tpu.dma_semaphore, #tpu.memory_space<semaphore_mem>>
    tpu.enqueue_dma source(%7 : memref<8x128xf32, #tpu.memory_space<any>>) target(%9 : memref<8x128xf32, #tpu.memory_space<vmem>>) target_semaphore(%11 : memref<!tpu.dma_semaphore, #tpu.memory_space<semaphore_mem>>)
    %c0_i32_7 = arith.constant 0 : i32
    %12 = arith.addi %0, %c0_i32_7 : i32
    %13 = arith.index_cast %12 : i32 to index
    %c1 = arith.constant 1 : index
    %14 = memref.load %arg1[%13, %c1] : memref<4x2xi32, #tpu.memory_space<smem>>
    %c120_i32_8 = arith.constant 120 : i32
    %15 = arith.minsi %14, %c120_i32_8 : i32
    %c128_i32_9 = arith.constant 128 : i32
    %16 = arith.muli %12, %c128_i32_9 : i32
    %17 = arith.addi %16, %15 : i32
    %c0_i32_10 = arith.constant 0 : i32
    %c1_i32 = arith.constant 1 : i32
    %c0_i32_11 = arith.constant 0 : i32
    %c1_i32_12 = arith.constant 1 : i32
    %c0_i32_13 = arith.constant 0 : i32
    %18 = tpu.memref_slice %arg3[%17, %c0_i32_13] : memref<512x128xf32, #tpu.memory_space<any>> -> memref<8x128xf32, #tpu.memory_space<any>>
    %c0_i32_14 = arith.constant 0 : i32
    %c0_i32_15 = arith.constant 0 : i32
    %19 = tpu.memref_slice %arg5[%c0_i32_10, %c1_i32, %c0_i32_14, %c0_i32_15] : memref<4x2x8x128xf32, #tpu.memory_space<vmem>> -> memref<1x1x8x128xf32, #tpu.memory_space<vmem>>
    %20 = tpu.memref_squeeze %19 : memref<1x1x8x128xf32, #tpu.memory_space<vmem>> -> memref<8x128xf32, #tpu.memory_space<vmem>>
    %21 = tpu.memref_slice %arg6[%c0_i32_11, %c1_i32_12] : memref<4x2x!tpu.dma_semaphore, #tpu.memory_space<semaphore_mem>> -> memref<1x1x!tpu.dma_semaphore, #tpu.memory_space<semaphore_mem>>
    %22 = tpu.memref_squeeze %21 : memref<1x1x!tpu.dma_semaphore, #tpu.memory_space<semaphore_mem>> -> memref<!tpu.dma_semaphore, #tpu.memory_space<semaphore_mem>>
    tpu.enqueue_dma source(%18 : memref<8x128xf32, #tpu.memory_space<any>>) target(%20 : memref<8x128xf32, #tpu.memory_space<vmem>>) target_semaphore(%22 : memref<!tpu.dma_semaphore, #tpu.memory_space<semaphore_mem>>)
    %c1_i32_16 = arith.constant 1 : i32
    %23 = arith.addi %0, %c1_i32_16 : i32
    %24 = arith.index_cast %23 : i32 to index
    %c0_17 = arith.constant 0 : index
    %25 = memref.load %arg1[%24, %c0_17] : memref<4x2xi32, #tpu.memory_space<smem>>
    %c120_i32_18 = arith.constant 120 : i32
    %26 = arith.minsi %25, %c120_i32_18 : i32
    %c128_i32_19 = arith.constant 128 : i32
    %27 = arith.muli %23, %c128_i32_19 : i32
    %28 = arith.addi %27, %26 : i32
    %c1_i32_20 = arith.constant 1 : i32
    %c0_i32_21 = arith.constant 0 : i32
    %c1_i32_22 = arith.constant 1 : i32
    %c0_i32_23 = arith.constant 0 : i32
    %c0_i32_24 = arith.constant 0 : i32
    %29 = tpu.memref_slice %arg3[%28, %c0_i32_24] : memref<512x128xf32, #tpu.memory_space<any>> -> memref<8x128xf32, #tpu.memory_space<any>>
    %c0_i32_25 = arith.constant 0 : i32
    %c0_i32_26 = arith.constant 0 : i32
    %30 = tpu.memref_slice %arg5[%c1_i32_20, %c0_i32_21, %c0_i32_25, %c0_i32_26] : memref<4x2x8x128xf32, #tpu.memory_space<vmem>> -> memref<1x1x8x128xf32, #tpu.memory_space<vmem>>
    %31 = tpu.memref_squeeze %30 : memref<1x1x8x128xf32, #tpu.memory_space<vmem>> -> memref<8x128xf32, #tpu.memory_space<vmem>>
    %32 = tpu.memref_slice %arg6[%c1_i32_22, %c0_i32_23] : memref<4x2x!tpu.dma_semaphore, #tpu.memory_space<semaphore_mem>> -> memref<1x1x!tpu.dma_semaphore, #tpu.memory_space<semaphore_mem>>
    %33 = tpu.memref_squeeze %32 : memref<1x1x!tpu.dma_semaphore, #tpu.memory_space<semaphore_mem>> -> memref<!tpu.dma_semaphore, #tpu.memory_space<semaphore_mem>>
    tpu.enqueue_dma source(%29 : memref<8x128xf32, #tpu.memory_space<any>>) target(%31 : memref<8x128xf32, #tpu.memory_space<vmem>>) target_semaphore(%33 : memref<!tpu.dma_semaphore, #tpu.memory_space<semaphore_mem>>)
    %c1_i32_27 = arith.constant 1 : i32
    %34 = arith.addi %0, %c1_i32_27 : i32
    %35 = arith.index_cast %34 : i32 to index
    %c1_28 = arith.constant 1 : index
    %36 = memref.load %arg1[%35, %c1_28] : memref<4x2xi32, #tpu.memory_space<smem>>
    %c120_i32_29 = arith.constant 120 : i32
    %37 = arith.minsi %36, %c120_i32_29 : i32
    %c128_i32_30 = arith.constant 128 : i32
    %38 = arith.muli %34, %c128_i32_30 : i32
    %39 = arith.addi %38, %37 : i32
    %c1_i32_31 = arith.constant 1 : i32
    %c1_i32_32 = arith.constant 1 : i32
    %c1_i32_33 = arith.constant 1 : i32
    %c1_i32_34 = arith.constant 1 : i32
    %c0_i32_35 = arith.constant 0 : i32
    %40 = tpu.memref_slice %arg3[%39, %c0_i32_35] : memref<512x128xf32, #tpu.memory_space<any>> -> memref<8x128xf32, #tpu.memory_space<any>>
    %c0_i32_36 = arith.constant 0 : i32
    %c0_i32_37 = arith.constant 0 : i32
    %41 = tpu.memref_slice %arg5[%c1_i32_31, %c1_i32_32, %c0_i32_36, %c0_i32_37] : memref<4x2x8x128xf32, #tpu.memory_space<vmem>> -> memref<1x1x8x128xf32, #tpu.memory_space<vmem>>
    %42 = tpu.memref_squeeze %41 : memref<1x1x8x128xf32, #tpu.memory_space<vmem>> -> memref<8x128xf32, #tpu.memory_space<vmem>>
    %43 = tpu.memref_slice %arg6[%c1_i32_33, %c1_i32_34] : memref<4x2x!tpu.dma_semaphore, #tpu.memory_space<semaphore_mem>> -> memref<1x1x!tpu.dma_semaphore, #tpu.memory_space<semaphore_mem>>
    %44 = tpu.memref_squeeze %43 : memref<1x1x!tpu.dma_semaphore, #tpu.memory_space<semaphore_mem>> -> memref<!tpu.dma_semaphore, #tpu.memory_space<semaphore_mem>>
    tpu.enqueue_dma source(%40 : memref<8x128xf32, #tpu.memory_space<any>>) target(%42 : memref<8x128xf32, #tpu.memory_space<vmem>>) target_semaphore(%44 : memref<!tpu.dma_semaphore, #tpu.memory_space<semaphore_mem>>)
    %c2_i32 = arith.constant 2 : i32
    %45 = arith.addi %0, %c2_i32 : i32
    %46 = arith.index_cast %45 : i32 to index
    %c0_38 = arith.constant 0 : index
    %47 = memref.load %arg1[%46, %c0_38] : memref<4x2xi32, #tpu.memory_space<smem>>
    %c120_i32_39 = arith.constant 120 : i32
    %48 = arith.minsi %47, %c120_i32_39 : i32
    %c128_i32_40 = arith.constant 128 : i32
    %49 = arith.muli %45, %c128_i32_40 : i32
    %50 = arith.addi %49, %48 : i32
    %c2_i32_41 = arith.constant 2 : i32
    %c0_i32_42 = arith.constant 0 : i32
    %c2_i32_43 = arith.constant 2 : i32
    %c0_i32_44 = arith.constant 0 : i32
    %c0_i32_45 = arith.constant 0 : i32
    %51 = tpu.memref_slice %arg3[%50, %c0_i32_45] : memref<512x128xf32, #tpu.memory_space<any>> -> memref<8x128xf32, #tpu.memory_space<any>>
    %c0_i32_46 = arith.constant 0 : i32
    %c0_i32_47 = arith.constant 0 : i32
    %52 = tpu.memref_slice %arg5[%c2_i32_41, %c0_i32_42, %c0_i32_46, %c0_i32_47] : memref<4x2x8x128xf32, #tpu.memory_space<vmem>> -> memref<1x1x8x128xf32, #tpu.memory_space<vmem>>
    %53 = tpu.memref_squeeze %52 : memref<1x1x8x128xf32, #tpu.memory_space<vmem>> -> memref<8x128xf32, #tpu.memory_space<vmem>>
    %54 = tpu.memref_slice %arg6[%c2_i32_43, %c0_i32_44] : memref<4x2x!tpu.dma_semaphore, #tpu.memory_space<semaphore_mem>> -> memref<1x1x!tpu.dma_semaphore, #tpu.memory_space<semaphore_mem>>
    %55 = tpu.memref_squeeze %54 : memref<1x1x!tpu.dma_semaphore, #tpu.memory_space<semaphore_mem>> -> memref<!tpu.dma_semaphore, #tpu.memory_space<semaphore_mem>>
    tpu.enqueue_dma source(%51 : memref<8x128xf32, #tpu.memory_space<any>>) target(%53 : memref<8x128xf32, #tpu.memory_space<vmem>>) target_semaphore(%55 : memref<!tpu.dma_semaphore, #tpu.memory_space<semaphore_mem>>)
    %c2_i32_48 = arith.constant 2 : i32
    %56 = arith.addi %0, %c2_i32_48 : i32
    %57 = arith.index_cast %56 : i32 to index
    %c1_49 = arith.constant 1 : index
    %58 = memref.load %arg1[%57, %c1_49] : memref<4x2xi32, #tpu.memory_space<smem>>
    %c120_i32_50 = arith.constant 120 : i32
    %59 = arith.minsi %58, %c120_i32_50 : i32
    %c128_i32_51 = arith.constant 128 : i32
    %60 = arith.muli %56, %c128_i32_51 : i32
    %61 = arith.addi %60, %59 : i32
    %c2_i32_52 = arith.constant 2 : i32
    %c1_i32_53 = arith.constant 1 : i32
    %c2_i32_54 = arith.constant 2 : i32
    %c1_i32_55 = arith.constant 1 : i32
    %c0_i32_56 = arith.constant 0 : i32
    %62 = tpu.memref_slice %arg3[%61, %c0_i32_56] : memref<512x128xf32, #tpu.memory_space<any>> -> memref<8x128xf32, #tpu.memory_space<any>>
    %c0_i32_57 = arith.constant 0 : i32
    %c0_i32_58 = arith.constant 0 : i32
    %63 = tpu.memref_slice %arg5[%c2_i32_52, %c1_i32_53, %c0_i32_57, %c0_i32_58] : memref<4x2x8x128xf32, #tpu.memory_space<vmem>> -> memref<1x1x8x128xf32, #tpu.memory_space<vmem>>
    %64 = tpu.memref_squeeze %63 : memref<1x1x8x128xf32, #tpu.memory_space<vmem>> -> memref<8x128xf32, #tpu.memory_space<vmem>>
    %65 = tpu.memref_slice %arg6[%c2_i32_54, %c1_i32_55] : memref<4x2x!tpu.dma_semaphore, #tpu.memory_space<semaphore_mem>> -> memref<1x1x!tpu.dma_semaphore, #tpu.memory_space<semaphore_mem>>
    %66 = tpu.memref_squeeze %65 : memref<1x1x!tpu.dma_semaphore, #tpu.memory_space<semaphore_mem>> -> memref<!tpu.dma_semaphore, #tpu.memory_space<semaphore_mem>>
    tpu.enqueue_dma source(%62 : memref<8x128xf32, #tpu.memory_space<any>>) target(%64 : memref<8x128xf32, #tpu.memory_space<vmem>>) target_semaphore(%66 : memref<!tpu.dma_semaphore, #tpu.memory_space<semaphore_mem>>)
    %c3_i32 = arith.constant 3 : i32
    %67 = arith.addi %0, %c3_i32 : i32
    %68 = arith.index_cast %67 : i32 to index
    %c0_59 = arith.constant 0 : index
    %69 = memref.load %arg1[%68, %c0_59] : memref<4x2xi32, #tpu.memory_space<smem>>
    %c120_i32_60 = arith.constant 120 : i32
    %70 = arith.minsi %69, %c120_i32_60 : i32
    %c128_i32_61 = arith.constant 128 : i32
    %71 = arith.muli %67, %c128_i32_61 : i32
    %72 = arith.addi %71, %70 : i32
    %c3_i32_62 = arith.constant 3 : i32
    %c0_i32_63 = arith.constant 0 : i32
    %c3_i32_64 = arith.constant 3 : i32
    %c0_i32_65 = arith.constant 0 : i32
    %c0_i32_66 = arith.constant 0 : i32
    %73 = tpu.memref_slice %arg3[%72, %c0_i32_66] : memref<512x128xf32, #tpu.memory_space<any>> -> memref<8x128xf32, #tpu.memory_space<any>>
    %c0_i32_67 = arith.constant 0 : i32
    %c0_i32_68 = arith.constant 0 : i32
    %74 = tpu.memref_slice %arg5[%c3_i32_62, %c0_i32_63, %c0_i32_67, %c0_i32_68] : memref<4x2x8x128xf32, #tpu.memory_space<vmem>> -> memref<1x1x8x128xf32, #tpu.memory_space<vmem>>
    %75 = tpu.memref_squeeze %74 : memref<1x1x8x128xf32, #tpu.memory_space<vmem>> -> memref<8x128xf32, #tpu.memory_space<vmem>>
    %76 = tpu.memref_slice %arg6[%c3_i32_64, %c0_i32_65] : memref<4x2x!tpu.dma_semaphore, #tpu.memory_space<semaphore_mem>> -> memref<1x1x!tpu.dma_semaphore, #tpu.memory_space<semaphore_mem>>
    %77 = tpu.memref_squeeze %76 : memref<1x1x!tpu.dma_semaphore, #tpu.memory_space<semaphore_mem>> -> memref<!tpu.dma_semaphore, #tpu.memory_space<semaphore_mem>>
    tpu.enqueue_dma source(%73 : memref<8x128xf32, #tpu.memory_space<any>>) target(%75 : memref<8x128xf32, #tpu.memory_space<vmem>>) target_semaphore(%77 : memref<!tpu.dma_semaphore, #tpu.memory_space<semaphore_mem>>)
    %c3_i32_69 = arith.constant 3 : i32
    %78 = arith.addi %0, %c3_i32_69 : i32
    %79 = arith.index_cast %78 : i32 to index
    %c1_70 = arith.constant 1 : index
    %80 = memref.load %arg1[%79, %c1_70] : memref<4x2xi32, #tpu.memory_space<smem>>
    %c120_i32_71 = arith.constant 120 : i32
    %81 = arith.minsi %80, %c120_i32_71 : i32
    %c128_i32_72 = arith.constant 128 : i32
    %82 = arith.muli %78, %c128_i32_72 : i32
    %83 = arith.addi %82, %81 : i32
    %c3_i32_73 = arith.constant 3 : i32
    %c1_i32_74 = arith.constant 1 : i32
    %c3_i32_75 = arith.constant 3 : i32
    %c1_i32_76 = arith.constant 1 : i32
    %c0_i32_77 = arith.constant 0 : i32
    %84 = tpu.memref_slice %arg3[%83, %c0_i32_77] : memref<512x128xf32, #tpu.memory_space<any>> -> memref<8x128xf32, #tpu.memory_space<any>>
    %c0_i32_78 = arith.constant 0 : i32
    %c0_i32_79 = arith.constant 0 : i32
    %85 = tpu.memref_slice %arg5[%c3_i32_73, %c1_i32_74, %c0_i32_78, %c0_i32_79] : memref<4x2x8x128xf32, #tpu.memory_space<vmem>> -> memref<1x1x8x128xf32, #tpu.memory_space<vmem>>
    %86 = tpu.memref_squeeze %85 : memref<1x1x8x128xf32, #tpu.memory_space<vmem>> -> memref<8x128xf32, #tpu.memory_space<vmem>>
    %87 = tpu.memref_slice %arg6[%c3_i32_75, %c1_i32_76] : memref<4x2x!tpu.dma_semaphore, #tpu.memory_space<semaphore_mem>> -> memref<1x1x!tpu.dma_semaphore, #tpu.memory_space<semaphore_mem>>
    %88 = tpu.memref_squeeze %87 : memref<1x1x!tpu.dma_semaphore, #tpu.memory_space<semaphore_mem>> -> memref<!tpu.dma_semaphore, #tpu.memory_space<semaphore_mem>>
    tpu.enqueue_dma source(%84 : memref<8x128xf32, #tpu.memory_space<any>>) target(%86 : memref<8x128xf32, #tpu.memory_space<vmem>>) target_semaphore(%88 : memref<!tpu.dma_semaphore, #tpu.memory_space<semaphore_mem>>)
    %c0_i32_80 = arith.constant 0 : i32
    %89 = arith.addi %0, %c0_i32_80 : i32
    %90 = arith.index_cast %89 : i32 to index
    %c0_81 = arith.constant 0 : index
    %91 = memref.load %arg1[%90, %c0_81] : memref<4x2xi32, #tpu.memory_space<smem>>
    %c120_i32_82 = arith.constant 120 : i32
    %92 = arith.minsi %91, %c120_i32_82 : i32
    %c128_i32_83 = arith.constant 128 : i32
    %93 = arith.muli %89, %c128_i32_83 : i32
    %94 = arith.addi %93, %92 : i32
    %c0_i32_84 = arith.constant 0 : i32
    %c0_i32_85 = arith.constant 0 : i32
    %c0_i32_86 = arith.constant 0 : i32
    %c0_i32_87 = arith.constant 0 : i32
    %c0_i32_88 = arith.constant 0 : i32
    %95 = tpu.memref_slice %arg3[%94, %c0_i32_88] : memref<512x128xf32, #tpu.memory_space<any>> -> memref<8x128xf32, #tpu.memory_space<any>>
    %c0_i32_89 = arith.constant 0 : i32
    %c0_i32_90 = arith.constant 0 : i32
    %96 = tpu.memref_slice %arg5[%c0_i32_84, %c0_i32_85, %c0_i32_89, %c0_i32_90] : memref<4x2x8x128xf32, #tpu.memory_space<vmem>> -> memref<1x1x8x128xf32, #tpu.memory_space<vmem>>
    %97 = tpu.memref_squeeze %96 : memref<1x1x8x128xf32, #tpu.memory_space<vmem>> -> memref<8x128xf32, #tpu.memory_space<vmem>>
    %98 = tpu.memref_slice %arg6[%c0_i32_86, %c0_i32_87] : memref<4x2x!tpu.dma_semaphore, #tpu.memory_space<semaphore_mem>> -> memref<1x1x!tpu.dma_semaphore, #tpu.memory_space<semaphore_mem>>
    %99 = tpu.memref_squeeze %98 : memref<1x1x!tpu.dma_semaphore, #tpu.memory_space<semaphore_mem>> -> memref<!tpu.dma_semaphore, #tpu.memory_space<semaphore_mem>>
    tpu.wait_dma2 semaphore(%99 : memref<!tpu.dma_semaphore, #tpu.memory_space<semaphore_mem>>) src(%95 : memref<8x128xf32, #tpu.memory_space<any>>) dst(%97 : memref<8x128xf32, #tpu.memory_space<vmem>>)
    %100 = tpu.iota {dimensions = array<i32: 0>} : vector<8x1xi32>
    %101 = vector.broadcast %92 : i32 to vector<8x1xi32>
    %102 = arith.addi %101, %100 : vector<8x1xi32>
    %false = arith.constant false
    %103 = vector.broadcast %false : i1 to vector<8x1xi1>
    %104 = arith.index_cast %89 : i32 to index
    %c0_91 = arith.constant 0 : index
    %105 = memref.load %arg1[%104, %c0_91] : memref<4x2xi32, #tpu.memory_space<smem>>
    %106 = arith.index_cast %89 : i32 to index
    %c0_92 = arith.constant 0 : index
    %107 = memref.load %arg2[%106, %c0_92] : memref<4x2xi32, #tpu.memory_space<smem>>
    %108 = arith.addi %105, %107 : i32
    %109 = vector.broadcast %105 : i32 to vector<8x1xi32>
    %110 = arith.cmpi sle, %109, %102 : vector<8x1xi32>
    %111 = vector.broadcast %108 : i32 to vector<8x1xi32>
    %112 = arith.cmpi slt, %102, %111 : vector<8x1xi32>
    %113 = arith.andi %110, %112 : vector<8x1xi1>
    %114 = arith.ori %103, %113 : vector<8x1xi1>
    %115 = arith.index_cast %89 : i32 to index
    %c1_93 = arith.constant 1 : index
    %116 = memref.load %arg1[%115, %c1_93] : memref<4x2xi32, #tpu.memory_space<smem>>
    %117 = arith.index_cast %89 : i32 to index
    %c1_94 = arith.constant 1 : index
    %118 = memref.load %arg2[%117, %c1_94] : memref<4x2xi32, #tpu.memory_space<smem>>
    %119 = arith.addi %116, %118 : i32
    %120 = vector.broadcast %116 : i32 to vector<8x1xi32>
    %121 = arith.cmpi sle, %120, %102 : vector<8x1xi32>
    %122 = vector.broadcast %119 : i32 to vector<8x1xi32>
    %123 = arith.cmpi slt, %102, %122 : vector<8x1xi32>
    %124 = arith.andi %121, %123 : vector<8x1xi1>
    %125 = arith.ori %114, %124 : vector<8x1xi1>
    %c0_95 = arith.constant 0 : index
    %c0_96 = arith.constant 0 : index
    %c0_97 = arith.constant 0 : index
    %c0_98 = arith.constant 0 : index
    %126 = vector.load %arg5[%c0_95, %c0_96, %c0_97, %c0_98] : memref<4x2x8x128xf32, #tpu.memory_space<vmem>>, vector<1x1x8x128xf32>
    %127 = vector.shape_cast %126 : vector<1x1x8x128xf32> to vector<8x128xf32>
    %cst = arith.constant 0.000000e+00 : f32
    %128 = vector.shape_cast %125 : vector<8x1xi1> to vector<8x1xi1>
    %129 = vector.broadcast %128 : vector<8x1xi1> to vector<8x128xi1>
    %130 = vector.broadcast %cst : f32 to vector<8x128xf32>
    %131 = arith.select %129, %130, %127 : vector<8x128xi1>, vector<8x128xf32>
    %c0_99 = arith.constant 0 : index
    %c0_100 = arith.constant 0 : index
    %c0_101 = arith.constant 0 : index
    %c0_102 = arith.constant 0 : index
    %132 = vector.load %arg5[%c0_99, %c0_100, %c0_101, %c0_102] : memref<4x2x8x128xf32, #tpu.memory_space<vmem>>, vector<1x1x8x128xf32>
    %133 = vector.shape_cast %132 : vector<1x1x8x128xf32> to vector<8x128xf32>
    %134 = vector.shape_cast %131 : vector<8x128xf32> to vector<1x1x8x128xf32>
    tpu.vector_store %arg5[%c0_99, %c0_100, %c0_101, %c0_102], %134 {strides = array<i32>} : memref<4x2x8x128xf32, #tpu.memory_space<vmem>>, vector<1x1x8x128xf32>,
    %c0_i32_103 = arith.constant 0 : i32
    %135 = arith.addi %0, %c0_i32_103 : i32
    %136 = arith.index_cast %135 : i32 to index
    %c1_104 = arith.constant 1 : index
    %137 = memref.load %arg1[%136, %c1_104] : memref<4x2xi32, #tpu.memory_space<smem>>
    %c120_i32_105 = arith.constant 120 : i32
    %138 = arith.minsi %137, %c120_i32_105 : i32
    %c128_i32_106 = arith.constant 128 : i32
    %139 = arith.muli %135, %c128_i32_106 : i32
    %140 = arith.addi %139, %138 : i32
    %c0_i32_107 = arith.constant 0 : i32
    %c1_i32_108 = arith.constant 1 : i32
    %c0_i32_109 = arith.constant 0 : i32
    %c1_i32_110 = arith.constant 1 : i32
    %c0_i32_111 = arith.constant 0 : i32
    %141 = tpu.memref_slice %arg3[%140, %c0_i32_111] : memref<512x128xf32, #tpu.memory_space<any>> -> memref<8x128xf32, #tpu.memory_space<any>>
    %c0_i32_112 = arith.constant 0 : i32
    %c0_i32_113 = arith.constant 0 : i32
    %142 = tpu.memref_slice %arg5[%c0_i32_107, %c1_i32_108, %c0_i32_112, %c0_i32_113] : memref<4x2x8x128xf32, #tpu.memory_space<vmem>> -> memref<1x1x8x128xf32, #tpu.memory_space<vmem>>
    %143 = tpu.memref_squeeze %142 : memref<1x1x8x128xf32, #tpu.memory_space<vmem>> -> memref<8x128xf32, #tpu.memory_space<vmem>>
    %144 = tpu.memref_slice %arg6[%c0_i32_109, %c1_i32_110] : memref<4x2x!tpu.dma_semaphore, #tpu.memory_space<semaphore_mem>> -> memref<1x1x!tpu.dma_semaphore, #tpu.memory_space<semaphore_mem>>
    %145 = tpu.memref_squeeze %144 : memref<1x1x!tpu.dma_semaphore, #tpu.memory_space<semaphore_mem>> -> memref<!tpu.dma_semaphore, #tpu.memory_space<semaphore_mem>>
    tpu.wait_dma2 semaphore(%145 : memref<!tpu.dma_semaphore, #tpu.memory_space<semaphore_mem>>) src(%141 : memref<8x128xf32, #tpu.memory_space<any>>) dst(%143 : memref<8x128xf32, #tpu.memory_space<vmem>>)
    %146 = tpu.iota {dimensions = array<i32: 0>} : vector<8x1xi32>
    %147 = vector.broadcast %138 : i32 to vector<8x1xi32>
    %148 = arith.addi %147, %146 : vector<8x1xi32>
    %false_114 = arith.constant false
    %149 = vector.broadcast %false_114 : i1 to vector<8x1xi1>
    %150 = arith.index_cast %135 : i32 to index
    %c0_115 = arith.constant 0 : index
    %151 = memref.load %arg1[%150, %c0_115] : memref<4x2xi32, #tpu.memory_space<smem>>
    %152 = arith.index_cast %135 : i32 to index
    %c0_116 = arith.constant 0 : index
    %153 = memref.load %arg2[%152, %c0_116] : memref<4x2xi32, #tpu.memory_space<smem>>
    %154 = arith.addi %151, %153 : i32
    %155 = vector.broadcast %151 : i32 to vector<8x1xi32>
    %156 = arith.cmpi sle, %155, %148 : vector<8x1xi32>
    %157 = vector.broadcast %154 : i32 to vector<8x1xi32>
    %158 = arith.cmpi slt, %148, %157 : vector<8x1xi32>
    %159 = arith.andi %156, %158 : vector<8x1xi1>
    %160 = arith.ori %149, %159 : vector<8x1xi1>
    %161 = arith.index_cast %135 : i32 to index
    %c1_117 = arith.constant 1 : index
    %162 = memref.load %arg1[%161, %c1_117] : memref<4x2xi32, #tpu.memory_space<smem>>
    %163 = arith.index_cast %135 : i32 to index
    %c1_118 = arith.constant 1 : index
    %164 = memref.load %arg2[%163, %c1_118] : memref<4x2xi32, #tpu.memory_space<smem>>
    %165 = arith.addi %162, %164 : i32
    %166 = vector.broadcast %162 : i32 to vector<8x1xi32>
    %167 = arith.cmpi sle, %166, %148 : vector<8x1xi32>
    %168 = vector.broadcast %165 : i32 to vector<8x1xi32>
    %169 = arith.cmpi slt, %148, %168 : vector<8x1xi32>
    %170 = arith.andi %167, %169 : vector<8x1xi1>
    %171 = arith.ori %160, %170 : vector<8x1xi1>
    %c0_119 = arith.constant 0 : index
    %c1_120 = arith.constant 1 : index
    %c0_121 = arith.constant 0 : index
    %c0_122 = arith.constant 0 : index
    %172 = vector.load %arg5[%c0_119, %c1_120, %c0_121, %c0_122] : memref<4x2x8x128xf32, #tpu.memory_space<vmem>>, vector<1x1x8x128xf32>
    %173 = vector.shape_cast %172 : vector<1x1x8x128xf32> to vector<8x128xf32>
    %cst_123 = arith.constant 0.000000e+00 : f32
    %174 = vector.shape_cast %171 : vector<8x1xi1> to vector<8x1xi1>
    %175 = vector.broadcast %174 : vector<8x1xi1> to vector<8x128xi1>
    %176 = vector.broadcast %cst_123 : f32 to vector<8x128xf32>
    %177 = arith.select %175, %176, %173 : vector<8x128xi1>, vector<8x128xf32>
    %c0_124 = arith.constant 0 : index
    %c1_125 = arith.constant 1 : index
    %c0_126 = arith.constant 0 : index
    %c0_127 = arith.constant 0 : index
    %178 = vector.load %arg5[%c0_124, %c1_125, %c0_126, %c0_127] : memref<4x2x8x128xf32, #tpu.memory_space<vmem>>, vector<1x1x8x128xf32>
    %179 = vector.shape_cast %178 : vector<1x1x8x128xf32> to vector<8x128xf32>
    %180 = vector.shape_cast %177 : vector<8x128xf32> to vector<1x1x8x128xf32>
    tpu.vector_store %arg5[%c0_124, %c1_125, %c0_126, %c0_127], %180 {strides = array<i32>} : memref<4x2x8x128xf32, #tpu.memory_space<vmem>>, vector<1x1x8x128xf32>,
    %c1_i32_128 = arith.constant 1 : i32
    %181 = arith.addi %0, %c1_i32_128 : i32
    %182 = arith.index_cast %181 : i32 to index
    %c0_129 = arith.constant 0 : index
    %183 = memref.load %arg1[%182, %c0_129] : memref<4x2xi32, #tpu.memory_space<smem>>
    %c120_i32_130 = arith.constant 120 : i32
    %184 = arith.minsi %183, %c120_i32_130 : i32
    %c128_i32_131 = arith.constant 128 : i32
    %185 = arith.muli %181, %c128_i32_131 : i32
    %186 = arith.addi %185, %184 : i32
    %c1_i32_132 = arith.constant 1 : i32
    %c0_i32_133 = arith.constant 0 : i32
    %c1_i32_134 = arith.constant 1 : i32
    %c0_i32_135 = arith.constant 0 : i32
    %c0_i32_136 = arith.constant 0 : i32
    %187 = tpu.memref_slice %arg3[%186, %c0_i32_136] : memref<512x128xf32, #tpu.memory_space<any>> -> memref<8x128xf32, #tpu.memory_space<any>>
    %c0_i32_137 = arith.constant 0 : i32
    %c0_i32_138 = arith.constant 0 : i32
    %188 = tpu.memref_slice %arg5[%c1_i32_132, %c0_i32_133, %c0_i32_137, %c0_i32_138] : memref<4x2x8x128xf32, #tpu.memory_space<vmem>> -> memref<1x1x8x128xf32, #tpu.memory_space<vmem>>
    %189 = tpu.memref_squeeze %188 : memref<1x1x8x128xf32, #tpu.memory_space<vmem>> -> memref<8x128xf32, #tpu.memory_space<vmem>>
    %190 = tpu.memref_slice %arg6[%c1_i32_134, %c0_i32_135] : memref<4x2x!tpu.dma_semaphore, #tpu.memory_space<semaphore_mem>> -> memref<1x1x!tpu.dma_semaphore, #tpu.memory_space<semaphore_mem>>
    %191 = tpu.memref_squeeze %190 : memref<1x1x!tpu.dma_semaphore, #tpu.memory_space<semaphore_mem>> -> memref<!tpu.dma_semaphore, #tpu.memory_space<semaphore_mem>>
    tpu.wait_dma2 semaphore(%191 : memref<!tpu.dma_semaphore, #tpu.memory_space<semaphore_mem>>) src(%187 : memref<8x128xf32, #tpu.memory_space<any>>) dst(%189 : memref<8x128xf32, #tpu.memory_space<vmem>>)
    %192 = tpu.iota {dimensions = array<i32: 0>} : vector<8x1xi32>
    %193 = vector.broadcast %184 : i32 to vector<8x1xi32>
    %194 = arith.addi %193, %192 : vector<8x1xi32>
    %false_139 = arith.constant false
    %195 = vector.broadcast %false_139 : i1 to vector<8x1xi1>
    %196 = arith.index_cast %181 : i32 to index
    %c0_140 = arith.constant 0 : index
    %197 = memref.load %arg1[%196, %c0_140] : memref<4x2xi32, #tpu.memory_space<smem>>
    %198 = arith.index_cast %181 : i32 to index
    %c0_141 = arith.constant 0 : index
    %199 = memref.load %arg2[%198, %c0_141] : memref<4x2xi32, #tpu.memory_space<smem>>
    %200 = arith.addi %197, %199 : i32
    %201 = vector.broadcast %197 : i32 to vector<8x1xi32>
    %202 = arith.cmpi sle, %201, %194 : vector<8x1xi32>
    %203 = vector.broadcast %200 : i32 to vector<8x1xi32>
    %204 = arith.cmpi slt, %194, %203 : vector<8x1xi32>
    %205 = arith.andi %202, %204 : vector<8x1xi1>
    %206 = arith.ori %195, %205 : vector<8x1xi1>
    %207 = arith.index_cast %181 : i32 to index
    %c1_142 = arith.constant 1 : index
    %208 = memref.load %arg1[%207, %c1_142] : memref<4x2xi32, #tpu.memory_space<smem>>
    %209 = arith.index_cast %181 : i32 to index
    %c1_143 = arith.constant 1 : index
    %210 = memref.load %arg2[%209, %c1_143] : memref<4x2xi32, #tpu.memory_space<smem>>
    %211 = arith.addi %208, %210 : i32
    %212 = vector.broadcast %208 : i32 to vector<8x1xi32>
    %213 = arith.cmpi sle, %212, %194 : vector<8x1xi32>
    %214 = vector.broadcast %211 : i32 to vector<8x1xi32>
    %215 = arith.cmpi slt, %194, %214 : vector<8x1xi32>
    %216 = arith.andi %213, %215 : vector<8x1xi1>
    %217 = arith.ori %206, %216 : vector<8x1xi1>
    %c1_144 = arith.constant 1 : index
    %c0_145 = arith.constant 0 : index
    %c0_146 = arith.constant 0 : index
    %c0_147 = arith.constant 0 : index
    %218 = vector.load %arg5[%c1_144, %c0_145, %c0_146, %c0_147] : memref<4x2x8x128xf32, #tpu.memory_space<vmem>>, vector<1x1x8x128xf32>
    %219 = vector.shape_cast %218 : vector<1x1x8x128xf32> to vector<8x128xf32>
    %cst_148 = arith.constant 0.000000e+00 : f32
    %220 = vector.shape_cast %217 : vector<8x1xi1> to vector<8x1xi1>
    %221 = vector.broadcast %220 : vector<8x1xi1> to vector<8x128xi1>
    %222 = vector.broadcast %cst_148 : f32 to vector<8x128xf32>
    %223 = arith.select %221, %222, %219 : vector<8x128xi1>, vector<8x128xf32>
    %c1_149 = arith.constant 1 : index
    %c0_150 = arith.constant 0 : index
    %c0_151 = arith.constant 0 : index
    %c0_152 = arith.constant 0 : index
    %224 = vector.load %arg5[%c1_149, %c0_150, %c0_151, %c0_152] : memref<4x2x8x128xf32, #tpu.memory_space<vmem>>, vector<1x1x8x128xf32>
    %225 = vector.shape_cast %224 : vector<1x1x8x128xf32> to vector<8x128xf32>
    %226 = vector.shape_cast %223 : vector<8x128xf32> to vector<1x1x8x128xf32>
    tpu.vector_store %arg5[%c1_149, %c0_150, %c0_151, %c0_152], %226 {strides = array<i32>} : memref<4x2x8x128xf32, #tpu.memory_space<vmem>>, vector<1x1x8x128xf32>,
    %c1_i32_153 = arith.constant 1 : i32
    %227 = arith.addi %0, %c1_i32_153 : i32
    %228 = arith.index_cast %227 : i32 to index
    %c1_154 = arith.constant 1 : index
    %229 = memref.load %arg1[%228, %c1_154] : memref<4x2xi32, #tpu.memory_space<smem>>
    %c120_i32_155 = arith.constant 120 : i32
    %230 = arith.minsi %229, %c120_i32_155 : i32
    %c128_i32_156 = arith.constant 128 : i32
    %231 = arith.muli %227, %c128_i32_156 : i32
    %232 = arith.addi %231, %230 : i32
    %c1_i32_157 = arith.constant 1 : i32
    %c1_i32_158 = arith.constant 1 : i32
    %c1_i32_159 = arith.constant 1 : i32
    %c1_i32_160 = arith.constant 1 : i32
    %c0_i32_161 = arith.constant 0 : i32
    %233 = tpu.memref_slice %arg3[%232, %c0_i32_161] : memref<512x128xf32, #tpu.memory_space<any>> -> memref<8x128xf32, #tpu.memory_space<any>>
    %c0_i32_162 = arith.constant 0 : i32
    %c0_i32_163 = arith.constant 0 : i32
    %234 = tpu.memref_slice %arg5[%c1_i32_157, %c1_i32_158, %c0_i32_162, %c0_i32_163] : memref<4x2x8x128xf32, #tpu.memory_space<vmem>> -> memref<1x1x8x128xf32, #tpu.memory_space<vmem>>
    %235 = tpu.memref_squeeze %234 : memref<1x1x8x128xf32, #tpu.memory_space<vmem>> -> memref<8x128xf32, #tpu.memory_space<vmem>>
    %236 = tpu.memref_slice %arg6[%c1_i32_159, %c1_i32_160] : memref<4x2x!tpu.dma_semaphore, #tpu.memory_space<semaphore_mem>> -> memref<1x1x!tpu.dma_semaphore, #tpu.memory_space<semaphore_mem>>
    %237 = tpu.memref_squeeze %236 : memref<1x1x!tpu.dma_semaphore, #tpu.memory_space<semaphore_mem>> -> memref<!tpu.dma_semaphore, #tpu.memory_space<semaphore_mem>>
    tpu.wait_dma2 semaphore(%237 : memref<!tpu.dma_semaphore, #tpu.memory_space<semaphore_mem>>) src(%233 : memref<8x128xf32, #tpu.memory_space<any>>) dst(%235 : memref<8x128xf32, #tpu.memory_space<vmem>>)
    %238 = tpu.iota {dimensions = array<i32: 0>} : vector<8x1xi32>
    %239 = vector.broadcast %230 : i32 to vector<8x1xi32>
    %240 = arith.addi %239, %238 : vector<8x1xi32>
    %false_164 = arith.constant false
    %241 = vector.broadcast %false_164 : i1 to vector<8x1xi1>
    %242 = arith.index_cast %227 : i32 to index
    %c0_165 = arith.constant 0 : index
    %243 = memref.load %arg1[%242, %c0_165] : memref<4x2xi32, #tpu.memory_space<smem>>
    %244 = arith.index_cast %227 : i32 to index
    %c0_166 = arith.constant 0 : index
    %245 = memref.load %arg2[%244, %c0_166] : memref<4x2xi32, #tpu.memory_space<smem>>
    %246 = arith.addi %243, %245 : i32
    %247 = vector.broadcast %243 : i32 to vector<8x1xi32>
    %248 = arith.cmpi sle, %247, %240 : vector<8x1xi32>
    %249 = vector.broadcast %246 : i32 to vector<8x1xi32>
    %250 = arith.cmpi slt, %240, %249 : vector<8x1xi32>
    %251 = arith.andi %248, %250 : vector<8x1xi1>
    %252 = arith.ori %241, %251 : vector<8x1xi1>
    %253 = arith.index_cast %227 : i32 to index
    %c1_167 = arith.constant 1 : index
    %254 = memref.load %arg1[%253, %c1_167] : memref<4x2xi32, #tpu.memory_space<smem>>
    %255 = arith.index_cast %227 : i32 to index
    %c1_168 = arith.constant 1 : index
    %256 = memref.load %arg2[%255, %c1_168] : memref<4x2xi32, #tpu.memory_space<smem>>
    %257 = arith.addi %254, %256 : i32
    %258 = vector.broadcast %254 : i32 to vector<8x1xi32>
    %259 = arith.cmpi sle, %258, %240 : vector<8x1xi32>
    %260 = vector.broadcast %257 : i32 to vector<8x1xi32>
    %261 = arith.cmpi slt, %240, %260 : vector<8x1xi32>
    %262 = arith.andi %259, %261 : vector<8x1xi1>
    %263 = arith.ori %252, %262 : vector<8x1xi1>
    %c1_169 = arith.constant 1 : index
    %c1_170 = arith.constant 1 : index
    %c0_171 = arith.constant 0 : index
    %c0_172 = arith.constant 0 : index
    %264 = vector.load %arg5[%c1_169, %c1_170, %c0_171, %c0_172] : memref<4x2x8x128xf32, #tpu.memory_space<vmem>>, vector<1x1x8x128xf32>
    %265 = vector.shape_cast %264 : vector<1x1x8x128xf32> to vector<8x128xf32>
    %cst_173 = arith.constant 0.000000e+00 : f32
    %266 = vector.shape_cast %263 : vector<8x1xi1> to vector<8x1xi1>
    %267 = vector.broadcast %266 : vector<8x1xi1> to vector<8x128xi1>
    %268 = vector.broadcast %cst_173 : f32 to vector<8x128xf32>
    %269 = arith.select %267, %268, %265 : vector<8x128xi1>, vector<8x128xf32>
    %c1_174 = arith.constant 1 : index
    %c1_175 = arith.constant 1 : index
    %c0_176 = arith.constant 0 : index
    %c0_177 = arith.constant 0 : index
    %270 = vector.load %arg5[%c1_174, %c1_175, %c0_176, %c0_177] : memref<4x2x8x128xf32, #tpu.memory_space<vmem>>, vector<1x1x8x128xf32>
    %271 = vector.shape_cast %270 : vector<1x1x8x128xf32> to vector<8x128xf32>
    %272 = vector.shape_cast %269 : vector<8x128xf32> to vector<1x1x8x128xf32>
    tpu.vector_store %arg5[%c1_174, %c1_175, %c0_176, %c0_177], %272 {strides = array<i32>} : memref<4x2x8x128xf32, #tpu.memory_space<vmem>>, vector<1x1x8x128xf32>,
    %c2_i32_178 = arith.constant 2 : i32
    %273 = arith.addi %0, %c2_i32_178 : i32
    %274 = arith.index_cast %273 : i32 to index
    %c0_179 = arith.constant 0 : index
    %275 = memref.load %arg1[%274, %c0_179] : memref<4x2xi32, #tpu.memory_space<smem>>
    %c120_i32_180 = arith.constant 120 : i32
    %276 = arith.minsi %275, %c120_i32_180 : i32
    %c128_i32_181 = arith.constant 128 : i32
    %277 = arith.muli %273, %c128_i32_181 : i32
    %278 = arith.addi %277, %276 : i32
    %c2_i32_182 = arith.constant 2 : i32
    %c0_i32_183 = arith.constant 0 : i32
    %c2_i32_184 = arith.constant 2 : i32
    %c0_i32_185 = arith.constant 0 : i32
    %c0_i32_186 = arith.constant 0 : i32
    %279 = tpu.memref_slice %arg3[%278, %c0_i32_186] : memref<512x128xf32, #tpu.memory_space<any>> -> memref<8x128xf32, #tpu.memory_space<any>>
    %c0_i32_187 = arith.constant 0 : i32
    %c0_i32_188 = arith.constant 0 : i32
    %280 = tpu.memref_slice %arg5[%c2_i32_182, %c0_i32_183, %c0_i32_187, %c0_i32_188] : memref<4x2x8x128xf32, #tpu.memory_space<vmem>> -> memref<1x1x8x128xf32, #tpu.memory_space<vmem>>
    %281 = tpu.memref_squeeze %280 : memref<1x1x8x128xf32, #tpu.memory_space<vmem>> -> memref<8x128xf32, #tpu.memory_space<vmem>>
    %282 = tpu.memref_slice %arg6[%c2_i32_184, %c0_i32_185] : memref<4x2x!tpu.dma_semaphore, #tpu.memory_space<semaphore_mem>> -> memref<1x1x!tpu.dma_semaphore, #tpu.memory_space<semaphore_mem>>
    %283 = tpu.memref_squeeze %282 : memref<1x1x!tpu.dma_semaphore, #tpu.memory_space<semaphore_mem>> -> memref<!tpu.dma_semaphore, #tpu.memory_space<semaphore_mem>>
    tpu.wait_dma2 semaphore(%283 : memref<!tpu.dma_semaphore, #tpu.memory_space<semaphore_mem>>) src(%279 : memref<8x128xf32, #tpu.memory_space<any>>) dst(%281 : memref<8x128xf32, #tpu.memory_space<vmem>>)
    %284 = tpu.iota {dimensions = array<i32: 0>} : vector<8x1xi32>
    %285 = vector.broadcast %276 : i32 to vector<8x1xi32>
    %286 = arith.addi %285, %284 : vector<8x1xi32>
    %false_189 = arith.constant false
    %287 = vector.broadcast %false_189 : i1 to vector<8x1xi1>
    %288 = arith.index_cast %273 : i32 to index
    %c0_190 = arith.constant 0 : index
    %289 = memref.load %arg1[%288, %c0_190] : memref<4x2xi32, #tpu.memory_space<smem>>
    %290 = arith.index_cast %273 : i32 to index
    %c0_191 = arith.constant 0 : index
    %291 = memref.load %arg2[%290, %c0_191] : memref<4x2xi32, #tpu.memory_space<smem>>
    %292 = arith.addi %289, %291 : i32
    %293 = vector.broadcast %289 : i32 to vector<8x1xi32>
    %294 = arith.cmpi sle, %293, %286 : vector<8x1xi32>
    %295 = vector.broadcast %292 : i32 to vector<8x1xi32>
    %296 = arith.cmpi slt, %286, %295 : vector<8x1xi32>
    %297 = arith.andi %294, %296 : vector<8x1xi1>
    %298 = arith.ori %287, %297 : vector<8x1xi1>
    %299 = arith.index_cast %273 : i32 to index
    %c1_192 = arith.constant 1 : index
    %300 = memref.load %arg1[%299, %c1_192] : memref<4x2xi32, #tpu.memory_space<smem>>
    %301 = arith.index_cast %273 : i32 to index
    %c1_193 = arith.constant 1 : index
    %302 = memref.load %arg2[%301, %c1_193] : memref<4x2xi32, #tpu.memory_space<smem>>
    %303 = arith.addi %300, %302 : i32
    %304 = vector.broadcast %300 : i32 to vector<8x1xi32>
    %305 = arith.cmpi sle, %304, %286 : vector<8x1xi32>
    %306 = vector.broadcast %303 : i32 to vector<8x1xi32>
    %307 = arith.cmpi slt, %286, %306 : vector<8x1xi32>
    %308 = arith.andi %305, %307 : vector<8x1xi1>
    %309 = arith.ori %298, %308 : vector<8x1xi1>
    %c2 = arith.constant 2 : index
    %c0_194 = arith.constant 0 : index
    %c0_195 = arith.constant 0 : index
    %c0_196 = arith.constant 0 : index
    %310 = vector.load %arg5[%c2, %c0_194, %c0_195, %c0_196] : memref<4x2x8x128xf32, #tpu.memory_space<vmem>>, vector<1x1x8x128xf32>
    %311 = vector.shape_cast %310 : vector<1x1x8x128xf32> to vector<8x128xf32>
    %cst_197 = arith.constant 0.000000e+00 : f32
    %312 = vector.shape_cast %309 : vector<8x1xi1> to vector<8x1xi1>
    %313 = vector.broadcast %312 : vector<8x1xi1> to vector<8x128xi1>
    %314 = vector.broadcast %cst_197 : f32 to vector<8x128xf32>
    %315 = arith.select %313, %314, %311 : vector<8x128xi1>, vector<8x128xf32>
    %c2_198 = arith.constant 2 : index
    %c0_199 = arith.constant 0 : index
    %c0_200 = arith.constant 0 : index
    %c0_201 = arith.constant 0 : index
    %316 = vector.load %arg5[%c2_198, %c0_199, %c0_200, %c0_201] : memref<4x2x8x128xf32, #tpu.memory_space<vmem>>, vector<1x1x8x128xf32>
    %317 = vector.shape_cast %316 : vector<1x1x8x128xf32> to vector<8x128xf32>
    %318 = vector.shape_cast %315 : vector<8x128xf32> to vector<1x1x8x128xf32>
    tpu.vector_store %arg5[%c2_198, %c0_199, %c0_200, %c0_201], %318 {strides = array<i32>} : memref<4x2x8x128xf32, #tpu.memory_space<vmem>>, vector<1x1x8x128xf32>,
    %c2_i32_202 = arith.constant 2 : i32
    %319 = arith.addi %0, %c2_i32_202 : i32
    %320 = arith.index_cast %319 : i32 to index
    %c1_203 = arith.constant 1 : index
    %321 = memref.load %arg1[%320, %c1_203] : memref<4x2xi32, #tpu.memory_space<smem>>
    %c120_i32_204 = arith.constant 120 : i32
    %322 = arith.minsi %321, %c120_i32_204 : i32
    %c128_i32_205 = arith.constant 128 : i32
    %323 = arith.muli %319, %c128_i32_205 : i32
    %324 = arith.addi %323, %322 : i32
    %c2_i32_206 = arith.constant 2 : i32
    %c1_i32_207 = arith.constant 1 : i32
    %c2_i32_208 = arith.constant 2 : i32
    %c1_i32_209 = arith.constant 1 : i32
    %c0_i32_210 = arith.constant 0 : i32
    %325 = tpu.memref_slice %arg3[%324, %c0_i32_210] : memref<512x128xf32, #tpu.memory_space<any>> -> memref<8x128xf32, #tpu.memory_space<any>>
    %c0_i32_211 = arith.constant 0 : i32
    %c0_i32_212 = arith.constant 0 : i32
    %326 = tpu.memref_slice %arg5[%c2_i32_206, %c1_i32_207, %c0_i32_211, %c0_i32_212] : memref<4x2x8x128xf32, #tpu.memory_space<vmem>> -> memref<1x1x8x128xf32, #tpu.memory_space<vmem>>
    %327 = tpu.memref_squeeze %326 : memref<1x1x8x128xf32, #tpu.memory_space<vmem>> -> memref<8x128xf32, #tpu.memory_space<vmem>>
    %328 = tpu.memref_slice %arg6[%c2_i32_208, %c1_i32_209] : memref<4x2x!tpu.dma_semaphore, #tpu.memory_space<semaphore_mem>> -> memref<1x1x!tpu.dma_semaphore, #tpu.memory_space<semaphore_mem>>
    %329 = tpu.memref_squeeze %328 : memref<1x1x!tpu.dma_semaphore, #tpu.memory_space<semaphore_mem>> -> memref<!tpu.dma_semaphore, #tpu.memory_space<semaphore_mem>>
    tpu.wait_dma2 semaphore(%329 : memref<!tpu.dma_semaphore, #tpu.memory_space<semaphore_mem>>) src(%325 : memref<8x128xf32, #tpu.memory_space<any>>) dst(%327 : memref<8x128xf32, #tpu.memory_space<vmem>>)
    %330 = tpu.iota {dimensions = array<i32: 0>} : vector<8x1xi32>
    %331 = vector.broadcast %322 : i32 to vector<8x1xi32>
    %332 = arith.addi %331, %330 : vector<8x1xi32>
    %false_213 = arith.constant false
    %333 = vector.broadcast %false_213 : i1 to vector<8x1xi1>
    %334 = arith.index_cast %319 : i32 to index
    %c0_214 = arith.constant 0 : index
    %335 = memref.load %arg1[%334, %c0_214] : memref<4x2xi32, #tpu.memory_space<smem>>
    %336 = arith.index_cast %319 : i32 to index
    %c0_215 = arith.constant 0 : index
    %337 = memref.load %arg2[%336, %c0_215] : memref<4x2xi32, #tpu.memory_space<smem>>
    %338 = arith.addi %335, %337 : i32
    %339 = vector.broadcast %335 : i32 to vector<8x1xi32>
    %340 = arith.cmpi sle, %339, %332 : vector<8x1xi32>
    %341 = vector.broadcast %338 : i32 to vector<8x1xi32>
    %342 = arith.cmpi slt, %332, %341 : vector<8x1xi32>
    %343 = arith.andi %340, %342 : vector<8x1xi1>
    %344 = arith.ori %333, %343 : vector<8x1xi1>
    %345 = arith.index_cast %319 : i32 to index
    %c1_216 = arith.constant 1 : index
    %346 = memref.load %arg1[%345, %c1_216] : memref<4x2xi32, #tpu.memory_space<smem>>
    %347 = arith.index_cast %319 : i32 to index
    %c1_217 = arith.constant 1 : index
    %348 = memref.load %arg2[%347, %c1_217] : memref<4x2xi32, #tpu.memory_space<smem>>
    %349 = arith.addi %346, %348 : i32
    %350 = vector.broadcast %346 : i32 to vector<8x1xi32>
    %351 = arith.cmpi sle, %350, %332 : vector<8x1xi32>
    %352 = vector.broadcast %349 : i32 to vector<8x1xi32>
    %353 = arith.cmpi slt, %332, %352 : vector<8x1xi32>
    %354 = arith.andi %351, %353 : vector<8x1xi1>
    %355 = arith.ori %344, %354 : vector<8x1xi1>
    %c2_218 = arith.constant 2 : index
    %c1_219 = arith.constant 1 : index
    %c0_220 = arith.constant 0 : index
    %c0_221 = arith.constant 0 : index
    %356 = vector.load %arg5[%c2_218, %c1_219, %c0_220, %c0_221] : memref<4x2x8x128xf32, #tpu.memory_space<vmem>>, vector<1x1x8x128xf32>
    %357 = vector.shape_cast %356 : vector<1x1x8x128xf32> to vector<8x128xf32>
    %cst_222 = arith.constant 0.000000e+00 : f32
    %358 = vector.shape_cast %355 : vector<8x1xi1> to vector<8x1xi1>
    %359 = vector.broadcast %358 : vector<8x1xi1> to vector<8x128xi1>
    %360 = vector.broadcast %cst_222 : f32 to vector<8x128xf32>
    %361 = arith.select %359, %360, %357 : vector<8x128xi1>, vector<8x128xf32>
    %c2_223 = arith.constant 2 : index
    %c1_224 = arith.constant 1 : index
    %c0_225 = arith.constant 0 : index
    %c0_226 = arith.constant 0 : index
    %362 = vector.load %arg5[%c2_223, %c1_224, %c0_225, %c0_226] : memref<4x2x8x128xf32, #tpu.memory_space<vmem>>, vector<1x1x8x128xf32>
    %363 = vector.shape_cast %362 : vector<1x1x8x128xf32> to vector<8x128xf32>
    %364 = vector.shape_cast %361 : vector<8x128xf32> to vector<1x1x8x128xf32>
    tpu.vector_store %arg5[%c2_223, %c1_224, %c0_225, %c0_226], %364 {strides = array<i32>} : memref<4x2x8x128xf32, #tpu.memory_space<vmem>>, vector<1x1x8x128xf32>,
    %c3_i32_227 = arith.constant 3 : i32
    %365 = arith.addi %0, %c3_i32_227 : i32
    %366 = arith.index_cast %365 : i32 to index
    %c0_228 = arith.constant 0 : index
    %367 = memref.load %arg1[%366, %c0_228] : memref<4x2xi32, #tpu.memory_space<smem>>
    %c120_i32_229 = arith.constant 120 : i32
    %368 = arith.minsi %367, %c120_i32_229 : i32
    %c128_i32_230 = arith.constant 128 : i32
    %369 = arith.muli %365, %c128_i32_230 : i32
    %370 = arith.addi %369, %368 : i32
    %c3_i32_231 = arith.constant 3 : i32
    %c0_i32_232 = arith.constant 0 : i32
    %c3_i32_233 = arith.constant 3 : i32
    %c0_i32_234 = arith.constant 0 : i32
    %c0_i32_235 = arith.constant 0 : i32
    %371 = tpu.memref_slice %arg3[%370, %c0_i32_235] : memref<512x128xf32, #tpu.memory_space<any>> -> memref<8x128xf32, #tpu.memory_space<any>>
    %c0_i32_236 = arith.constant 0 : i32
    %c0_i32_237 = arith.constant 0 : i32
    %372 = tpu.memref_slice %arg5[%c3_i32_231, %c0_i32_232, %c0_i32_236, %c0_i32_237] : memref<4x2x8x128xf32, #tpu.memory_space<vmem>> -> memref<1x1x8x128xf32, #tpu.memory_space<vmem>>
    %373 = tpu.memref_squeeze %372 : memref<1x1x8x128xf32, #tpu.memory_space<vmem>> -> memref<8x128xf32, #tpu.memory_space<vmem>>
    %374 = tpu.memref_slice %arg6[%c3_i32_233, %c0_i32_234] : memref<4x2x!tpu.dma_semaphore, #tpu.memory_space<semaphore_mem>> -> memref<1x1x!tpu.dma_semaphore, #tpu.memory_space<semaphore_mem>>
    %375 = tpu.memref_squeeze %374 : memref<1x1x!tpu.dma_semaphore, #tpu.memory_space<semaphore_mem>> -> memref<!tpu.dma_semaphore, #tpu.memory_space<semaphore_mem>>
    tpu.wait_dma2 semaphore(%375 : memref<!tpu.dma_semaphore, #tpu.memory_space<semaphore_mem>>) src(%371 : memref<8x128xf32, #tpu.memory_space<any>>) dst(%373 : memref<8x128xf32, #tpu.memory_space<vmem>>)
    %376 = tpu.iota {dimensions = array<i32: 0>} : vector<8x1xi32>
    %377 = vector.broadcast %368 : i32 to vector<8x1xi32>
    %378 = arith.addi %377, %376 : vector<8x1xi32>
    %false_238 = arith.constant false
    %379 = vector.broadcast %false_238 : i1 to vector<8x1xi1>
    %380 = arith.index_cast %365 : i32 to index
    %c0_239 = arith.constant 0 : index
    %381 = memref.load %arg1[%380, %c0_239] : memref<4x2xi32, #tpu.memory_space<smem>>
    %382 = arith.index_cast %365 : i32 to index
    %c0_240 = arith.constant 0 : index
    %383 = memref.load %arg2[%382, %c0_240] : memref<4x2xi32, #tpu.memory_space<smem>>
    %384 = arith.addi %381, %383 : i32
    %385 = vector.broadcast %381 : i32 to vector<8x1xi32>
    %386 = arith.cmpi sle, %385, %378 : vector<8x1xi32>
    %387 = vector.broadcast %384 : i32 to vector<8x1xi32>
    %388 = arith.cmpi slt, %378, %387 : vector<8x1xi32>
    %389 = arith.andi %386, %388 : vector<8x1xi1>
    %390 = arith.ori %379, %389 : vector<8x1xi1>
    %391 = arith.index_cast %365 : i32 to index
    %c1_241 = arith.constant 1 : index
    %392 = memref.load %arg1[%391, %c1_241] : memref<4x2xi32, #tpu.memory_space<smem>>
    %393 = arith.index_cast %365 : i32 to index
    %c1_242 = arith.constant 1 : index
    %394 = memref.load %arg2[%393, %c1_242] : memref<4x2xi32, #tpu.memory_space<smem>>
    %395 = arith.addi %392, %394 : i32
    %396 = vector.broadcast %392 : i32 to vector<8x1xi32>
    %397 = arith.cmpi sle, %396, %378 : vector<8x1xi32>
    %398 = vector.broadcast %395 : i32 to vector<8x1xi32>
    %399 = arith.cmpi slt, %378, %398 : vector<8x1xi32>
    %400 = arith.andi %397, %399 : vector<8x1xi1>
    %401 = arith.ori %390, %400 : vector<8x1xi1>
    %c3 = arith.constant 3 : index
    %c0_243 = arith.constant 0 : index
    %c0_244 = arith.constant 0 : index
    %c0_245 = arith.constant 0 : index
    %402 = vector.load %arg5[%c3, %c0_243, %c0_244, %c0_245] : memref<4x2x8x128xf32, #tpu.memory_space<vmem>>, vector<1x1x8x128xf32>
    %403 = vector.shape_cast %402 : vector<1x1x8x128xf32> to vector<8x128xf32>
    %cst_246 = arith.constant 0.000000e+00 : f32
    %404 = vector.shape_cast %401 : vector<8x1xi1> to vector<8x1xi1>
    %405 = vector.broadcast %404 : vector<8x1xi1> to vector<8x128xi1>
    %406 = vector.broadcast %cst_246 : f32 to vector<8x128xf32>
    %407 = arith.select %405, %406, %403 : vector<8x128xi1>, vector<8x128xf32>
    %c3_247 = arith.constant 3 : index
    %c0_248 = arith.constant 0 : index
    %c0_249 = arith.constant 0 : index
    %c0_250 = arith.constant 0 : index
    %408 = vector.load %arg5[%c3_247, %c0_248, %c0_249, %c0_250] : memref<4x2x8x128xf32, #tpu.memory_space<vmem>>, vector<1x1x8x128xf32>
    %409 = vector.shape_cast %408 : vector<1x1x8x128xf32> to vector<8x128xf32>
    %410 = vector.shape_cast %407 : vector<8x128xf32> to vector<1x1x8x128xf32>
    tpu.vector_store %arg5[%c3_247, %c0_248, %c0_249, %c0_250], %410 {strides = array<i32>} : memref<4x2x8x128xf32, #tpu.memory_space<vmem>>, vector<1x1x8x128xf32>,
    %c3_i32_251 = arith.constant 3 : i32
    %411 = arith.addi %0, %c3_i32_251 : i32
    %412 = arith.index_cast %411 : i32 to index
    %c1_252 = arith.constant 1 : index
    %413 = memref.load %arg1[%412, %c1_252] : memref<4x2xi32, #tpu.memory_space<smem>>
    %c120_i32_253 = arith.constant 120 : i32
    %414 = arith.minsi %413, %c120_i32_253 : i32
    %c128_i32_254 = arith.constant 128 : i32
    %415 = arith.muli %411, %c128_i32_254 : i32
    %416 = arith.addi %415, %414 : i32
    %c3_i32_255 = arith.constant 3 : i32
    %c1_i32_256 = arith.constant 1 : i32
    %c3_i32_257 = arith.constant 3 : i32
    %c1_i32_258 = arith.constant 1 : i32
    %c0_i32_259 = arith.constant 0 : i32
    %417 = tpu.memref_slice %arg3[%416, %c0_i32_259] : memref<512x128xf32, #tpu.memory_space<any>> -> memref<8x128xf32, #tpu.memory_space<any>>
    %c0_i32_260 = arith.constant 0 : i32
    %c0_i32_261 = arith.constant 0 : i32
    %418 = tpu.memref_slice %arg5[%c3_i32_255, %c1_i32_256, %c0_i32_260, %c0_i32_261] : memref<4x2x8x128xf32, #tpu.memory_space<vmem>> -> memref<1x1x8x128xf32, #tpu.memory_space<vmem>>
    %419 = tpu.memref_squeeze %418 : memref<1x1x8x128xf32, #tpu.memory_space<vmem>> -> memref<8x128xf32, #tpu.memory_space<vmem>>
    %420 = tpu.memref_slice %arg6[%c3_i32_257, %c1_i32_258] : memref<4x2x!tpu.dma_semaphore, #tpu.memory_space<semaphore_mem>> -> memref<1x1x!tpu.dma_semaphore, #tpu.memory_space<semaphore_mem>>
    %421 = tpu.memref_squeeze %420 : memref<1x1x!tpu.dma_semaphore, #tpu.memory_space<semaphore_mem>> -> memref<!tpu.dma_semaphore, #tpu.memory_space<semaphore_mem>>
    tpu.wait_dma2 semaphore(%421 : memref<!tpu.dma_semaphore, #tpu.memory_space<semaphore_mem>>) src(%417 : memref<8x128xf32, #tpu.memory_space<any>>) dst(%419 : memref<8x128xf32, #tpu.memory_space<vmem>>)
    %422 = tpu.iota {dimensions = array<i32: 0>} : vector<8x1xi32>
    %423 = vector.broadcast %414 : i32 to vector<8x1xi32>
    %424 = arith.addi %423, %422 : vector<8x1xi32>
    %false_262 = arith.constant false
    %425 = vector.broadcast %false_262 : i1 to vector<8x1xi1>
    %426 = arith.index_cast %411 : i32 to index
    %c0_263 = arith.constant 0 : index
    %427 = memref.load %arg1[%426, %c0_263] : memref<4x2xi32, #tpu.memory_space<smem>>
    %428 = arith.index_cast %411 : i32 to index
    %c0_264 = arith.constant 0 : index
    %429 = memref.load %arg2[%428, %c0_264] : memref<4x2xi32, #tpu.memory_space<smem>>
    %430 = arith.addi %427, %429 : i32
    %431 = vector.broadcast %427 : i32 to vector<8x1xi32>
    %432 = arith.cmpi sle, %431, %424 : vector<8x1xi32>
    %433 = vector.broadcast %430 : i32 to vector<8x1xi32>
    %434 = arith.cmpi slt, %424, %433 : vector<8x1xi32>
    %435 = arith.andi %432, %434 : vector<8x1xi1>
    %436 = arith.ori %425, %435 : vector<8x1xi1>
    %437 = arith.index_cast %411 : i32 to index
    %c1_265 = arith.constant 1 : index
    %438 = memref.load %arg1[%437, %c1_265] : memref<4x2xi32, #tpu.memory_space<smem>>
    %439 = arith.index_cast %411 : i32 to index
    %c1_266 = arith.constant 1 : index
    %440 = memref.load %arg2[%439, %c1_266] : memref<4x2xi32, #tpu.memory_space<smem>>
    %441 = arith.addi %438, %440 : i32
    %442 = vector.broadcast %438 : i32 to vector<8x1xi32>
    %443 = arith.cmpi sle, %442, %424 : vector<8x1xi32>
    %444 = vector.broadcast %441 : i32 to vector<8x1xi32>
    %445 = arith.cmpi slt, %424, %444 : vector<8x1xi32>
    %446 = arith.andi %443, %445 : vector<8x1xi1>
    %447 = arith.ori %436, %446 : vector<8x1xi1>
    %c3_267 = arith.constant 3 : index
    %c1_268 = arith.constant 1 : index
    %c0_269 = arith.constant 0 : index
    %c0_270 = arith.constant 0 : index
    %448 = vector.load %arg5[%c3_267, %c1_268, %c0_269, %c0_270] : memref<4x2x8x128xf32, #tpu.memory_space<vmem>>, vector<1x1x8x128xf32>
    %449 = vector.shape_cast %448 : vector<1x1x8x128xf32> to vector<8x128xf32>
    %cst_271 = arith.constant 0.000000e+00 : f32
    %450 = vector.shape_cast %447 : vector<8x1xi1> to vector<8x1xi1>
    %451 = vector.broadcast %450 : vector<8x1xi1> to vector<8x128xi1>
    %452 = vector.broadcast %cst_271 : f32 to vector<8x128xf32>
    %453 = arith.select %451, %452, %449 : vector<8x128xi1>, vector<8x128xf32>
    %c3_272 = arith.constant 3 : index
    %c1_273 = arith.constant 1 : index
    %c0_274 = arith.constant 0 : index
    %c0_275 = arith.constant 0 : index
    %454 = vector.load %arg5[%c3_272, %c1_273, %c0_274, %c0_275] : memref<4x2x8x128xf32, #tpu.memory_space<vmem>>, vector<1x1x8x128xf32>
    %455 = vector.shape_cast %454 : vector<1x1x8x128xf32> to vector<8x128xf32>
    %456 = vector.shape_cast %453 : vector<8x128xf32> to vector<1x1x8x128xf32>
    tpu.vector_store %arg5[%c3_272, %c1_273, %c0_274, %c0_275], %456 {strides = array<i32>} : memref<4x2x8x128xf32, #tpu.memory_space<vmem>>, vector<1x1x8x128xf32>,
    %c0_i32_276 = arith.constant 0 : i32
    %457 = arith.addi %0, %c0_i32_276 : i32
    %458 = arith.index_cast %457 : i32 to index
    %c0_277 = arith.constant 0 : index
    %459 = memref.load %arg1[%458, %c0_277] : memref<4x2xi32, #tpu.memory_space<smem>>
    %c120_i32_278 = arith.constant 120 : i32
    %460 = arith.minsi %459, %c120_i32_278 : i32
    %c128_i32_279 = arith.constant 128 : i32
    %461 = arith.muli %457, %c128_i32_279 : i32
    %462 = arith.addi %461, %460 : i32
    %c0_i32_280 = arith.constant 0 : i32
    %c0_i32_281 = arith.constant 0 : i32
    %c0_i32_282 = arith.constant 0 : i32
    %c0_i32_283 = arith.constant 0 : i32
    %c0_i32_284 = arith.constant 0 : i32
    %c0_i32_285 = arith.constant 0 : i32
    %463 = tpu.memref_slice %arg5[%c0_i32_280, %c0_i32_281, %c0_i32_284, %c0_i32_285] : memref<4x2x8x128xf32, #tpu.memory_space<vmem>> -> memref<1x1x8x128xf32, #tpu.memory_space<vmem>>
    %464 = tpu.memref_squeeze %463 : memref<1x1x8x128xf32, #tpu.memory_space<vmem>> -> memref<8x128xf32, #tpu.memory_space<vmem>>
    %c0_i32_286 = arith.constant 0 : i32
    %465 = tpu.memref_slice %arg4[%462, %c0_i32_286] : memref<512x128xf32, #tpu.memory_space<any>> -> memref<8x128xf32, #tpu.memory_space<any>>
    %466 = tpu.memref_slice %arg6[%c0_i32_282, %c0_i32_283] : memref<4x2x!tpu.dma_semaphore, #tpu.memory_space<semaphore_mem>> -> memref<1x1x!tpu.dma_semaphore, #tpu.memory_space<semaphore_mem>>
    %467 = tpu.memref_squeeze %466 : memref<1x1x!tpu.dma_semaphore, #tpu.memory_space<semaphore_mem>> -> memref<!tpu.dma_semaphore, #tpu.memory_space<semaphore_mem>>
    tpu.enqueue_dma source(%464 : memref<8x128xf32, #tpu.memory_space<vmem>>) target(%465 : memref<8x128xf32, #tpu.memory_space<any>>) target_semaphore(%467 : memref<!tpu.dma_semaphore, #tpu.memory_space<semaphore_mem>>)
    %c0_i32_287 = arith.constant 0 : i32
    %468 = arith.addi %0, %c0_i32_287 : i32
    %469 = arith.index_cast %468 : i32 to index
    %c1_288 = arith.constant 1 : index
    %470 = memref.load %arg1[%469, %c1_288] : memref<4x2xi32, #tpu.memory_space<smem>>
    %c120_i32_289 = arith.constant 120 : i32
    %471 = arith.minsi %470, %c120_i32_289 : i32
    %c128_i32_290 = arith.constant 128 : i32
    %472 = arith.muli %468, %c128_i32_290 : i32
    %473 = arith.addi %472, %471 : i32
    %c0_i32_291 = arith.constant 0 : i32
    %c1_i32_292 = arith.constant 1 : i32
    %c0_i32_293 = arith.constant 0 : i32
    %c1_i32_294 = arith.constant 1 : i32
    %c0_i32_295 = arith.constant 0 : i32
    %c0_i32_296 = arith.constant 0 : i32
    %474 = tpu.memref_slice %arg5[%c0_i32_291, %c1_i32_292, %c0_i32_295, %c0_i32_296] : memref<4x2x8x128xf32, #tpu.memory_space<vmem>> -> memref<1x1x8x128xf32, #tpu.memory_space<vmem>>
    %475 = tpu.memref_squeeze %474 : memref<1x1x8x128xf32, #tpu.memory_space<vmem>> -> memref<8x128xf32, #tpu.memory_space<vmem>>
    %c0_i32_297 = arith.constant 0 : i32
    %476 = tpu.memref_slice %arg4[%473, %c0_i32_297] : memref<512x128xf32, #tpu.memory_space<any>> -> memref<8x128xf32, #tpu.memory_space<any>>
    %477 = tpu.memref_slice %arg6[%c0_i32_293, %c1_i32_294] : memref<4x2x!tpu.dma_semaphore, #tpu.memory_space<semaphore_mem>> -> memref<1x1x!tpu.dma_semaphore, #tpu.memory_space<semaphore_mem>>
    %478 = tpu.memref_squeeze %477 : memref<1x1x!tpu.dma_semaphore, #tpu.memory_space<semaphore_mem>> -> memref<!tpu.dma_semaphore, #tpu.memory_space<semaphore_mem>>
    tpu.enqueue_dma source(%475 : memref<8x128xf32, #tpu.memory_space<vmem>>) target(%476 : memref<8x128xf32, #tpu.memory_space<any>>) target_semaphore(%478 : memref<!tpu.dma_semaphore, #tpu.memory_space<semaphore_mem>>)
    %c1_i32_298 = arith.constant 1 : i32
    %479 = arith.addi %0, %c1_i32_298 : i32
    %480 = arith.index_cast %479 : i32 to index
    %c0_299 = arith.constant 0 : index
    %481 = memref.load %arg1[%480, %c0_299] : memref<4x2xi32, #tpu.memory_space<smem>>
    %c120_i32_300 = arith.constant 120 : i32
    %482 = arith.minsi %481, %c120_i32_300 : i32
    %c128_i32_301 = arith.constant 128 : i32
    %483 = arith.muli %479, %c128_i32_301 : i32
    %484 = arith.addi %483, %482 : i32
    %c1_i32_302 = arith.constant 1 : i32
    %c0_i32_303 = arith.constant 0 : i32
    %c1_i32_304 = arith.constant 1 : i32
    %c0_i32_305 = arith.constant 0 : i32
    %c0_i32_306 = arith.constant 0 : i32
    %c0_i32_307 = arith.constant 0 : i32
    %485 = tpu.memref_slice %arg5[%c1_i32_302, %c0_i32_303, %c0_i32_306, %c0_i32_307] : memref<4x2x8x128xf32, #tpu.memory_space<vmem>> -> memref<1x1x8x128xf32, #tpu.memory_space<vmem>>
    %486 = tpu.memref_squeeze %485 : memref<1x1x8x128xf32, #tpu.memory_space<vmem>> -> memref<8x128xf32, #tpu.memory_space<vmem>>
    %c0_i32_308 = arith.constant 0 : i32
    %487 = tpu.memref_slice %arg4[%484, %c0_i32_308] : memref<512x128xf32, #tpu.memory_space<any>> -> memref<8x128xf32, #tpu.memory_space<any>>
    %488 = tpu.memref_slice %arg6[%c1_i32_304, %c0_i32_305] : memref<4x2x!tpu.dma_semaphore, #tpu.memory_space<semaphore_mem>> -> memref<1x1x!tpu.dma_semaphore, #tpu.memory_space<semaphore_mem>>
    %489 = tpu.memref_squeeze %488 : memref<1x1x!tpu.dma_semaphore, #tpu.memory_space<semaphore_mem>> -> memref<!tpu.dma_semaphore, #tpu.memory_space<semaphore_mem>>
    tpu.enqueue_dma source(%486 : memref<8x128xf32, #tpu.memory_space<vmem>>) target(%487 : memref<8x128xf32, #tpu.memory_space<any>>) target_semaphore(%489 : memref<!tpu.dma_semaphore, #tpu.memory_space<semaphore_mem>>)
    %c1_i32_309 = arith.constant 1 : i32
    %490 = arith.addi %0, %c1_i32_309 : i32
    %491 = arith.index_cast %490 : i32 to index
    %c1_310 = arith.constant 1 : index
    %492 = memref.load %arg1[%491, %c1_310] : memref<4x2xi32, #tpu.memory_space<smem>>
    %c120_i32_311 = arith.constant 120 : i32
    %493 = arith.minsi %492, %c120_i32_311 : i32
    %c128_i32_312 = arith.constant 128 : i32
    %494 = arith.muli %490, %c128_i32_312 : i32
    %495 = arith.addi %494, %493 : i32
    %c1_i32_313 = arith.constant 1 : i32
    %c1_i32_314 = arith.constant 1 : i32
    %c1_i32_315 = arith.constant 1 : i32
    %c1_i32_316 = arith.constant 1 : i32
    %c0_i32_317 = arith.constant 0 : i32
    %c0_i32_318 = arith.constant 0 : i32
    %496 = tpu.memref_slice %arg5[%c1_i32_313, %c1_i32_314, %c0_i32_317, %c0_i32_318] : memref<4x2x8x128xf32, #tpu.memory_space<vmem>> -> memref<1x1x8x128xf32, #tpu.memory_space<vmem>>
    %497 = tpu.memref_squeeze %496 : memref<1x1x8x128xf32, #tpu.memory_space<vmem>> -> memref<8x128xf32, #tpu.memory_space<vmem>>
    %c0_i32_319 = arith.constant 0 : i32
    %498 = tpu.memref_slice %arg4[%495, %c0_i32_319] : memref<512x128xf32, #tpu.memory_space<any>> -> memref<8x128xf32, #tpu.memory_space<any>>
    %499 = tpu.memref_slice %arg6[%c1_i32_315, %c1_i32_316] : memref<4x2x!tpu.dma_semaphore, #tpu.memory_space<semaphore_mem>> -> memref<1x1x!tpu.dma_semaphore, #tpu.memory_space<semaphore_mem>>
    %500 = tpu.memref_squeeze %499 : memref<1x1x!tpu.dma_semaphore, #tpu.memory_space<semaphore_mem>> -> memref<!tpu.dma_semaphore, #tpu.memory_space<semaphore_mem>>
    tpu.enqueue_dma source(%497 : memref<8x128xf32, #tpu.memory_space<vmem>>) target(%498 : memref<8x128xf32, #tpu.memory_space<any>>) target_semaphore(%500 : memref<!tpu.dma_semaphore, #tpu.memory_space<semaphore_mem>>)
    %c2_i32_320 = arith.constant 2 : i32
    %501 = arith.addi %0, %c2_i32_320 : i32
    %502 = arith.index_cast %501 : i32 to index
    %c0_321 = arith.constant 0 : index
    %503 = memref.load %arg1[%502, %c0_321] : memref<4x2xi32, #tpu.memory_space<smem>>
    %c120_i32_322 = arith.constant 120 : i32
    %504 = arith.minsi %503, %c120_i32_322 : i32
    %c128_i32_323 = arith.constant 128 : i32
    %505 = arith.muli %501, %c128_i32_323 : i32
    %506 = arith.addi %505, %504 : i32
    %c2_i32_324 = arith.constant 2 : i32
    %c0_i32_325 = arith.constant 0 : i32
    %c2_i32_326 = arith.constant 2 : i32
    %c0_i32_327 = arith.constant 0 : i32
    %c0_i32_328 = arith.constant 0 : i32
    %c0_i32_329 = arith.constant 0 : i32
    %507 = tpu.memref_slice %arg5[%c2_i32_324, %c0_i32_325, %c0_i32_328, %c0_i32_329] : memref<4x2x8x128xf32, #tpu.memory_space<vmem>> -> memref<1x1x8x128xf32, #tpu.memory_space<vmem>>
    %508 = tpu.memref_squeeze %507 : memref<1x1x8x128xf32, #tpu.memory_space<vmem>> -> memref<8x128xf32, #tpu.memory_space<vmem>>
    %c0_i32_330 = arith.constant 0 : i32
    %509 = tpu.memref_slice %arg4[%506, %c0_i32_330] : memref<512x128xf32, #tpu.memory_space<any>> -> memref<8x128xf32, #tpu.memory_space<any>>
    %510 = tpu.memref_slice %arg6[%c2_i32_326, %c0_i32_327] : memref<4x2x!tpu.dma_semaphore, #tpu.memory_space<semaphore_mem>> -> memref<1x1x!tpu.dma_semaphore, #tpu.memory_space<semaphore_mem>>
    %511 = tpu.memref_squeeze %510 : memref<1x1x!tpu.dma_semaphore, #tpu.memory_space<semaphore_mem>> -> memref<!tpu.dma_semaphore, #tpu.memory_space<semaphore_mem>>
    tpu.enqueue_dma source(%508 : memref<8x128xf32, #tpu.memory_space<vmem>>) target(%509 : memref<8x128xf32, #tpu.memory_space<any>>) target_semaphore(%511 : memref<!tpu.dma_semaphore, #tpu.memory_space<semaphore_mem>>)
    %c2_i32_331 = arith.constant 2 : i32
    %512 = arith.addi %0, %c2_i32_331 : i32
    %513 = arith.index_cast %512 : i32 to index
    %c1_332 = arith.constant 1 : index
    %514 = memref.load %arg1[%513, %c1_332] : memref<4x2xi32, #tpu.memory_space<smem>>
    %c120_i32_333 = arith.constant 120 : i32
    %515 = arith.minsi %514, %c120_i32_333 : i32
    %c128_i32_334 = arith.constant 128 : i32
    %516 = arith.muli %512, %c128_i32_334 : i32
    %517 = arith.addi %516, %515 : i32
    %c2_i32_335 = arith.constant 2 : i32
    %c1_i32_336 = arith.constant 1 : i32
    %c2_i32_337 = arith.constant 2 : i32
    %c1_i32_338 = arith.constant 1 : i32
    %c0_i32_339 = arith.constant 0 : i32
    %c0_i32_340 = arith.constant 0 : i32
    %518 = tpu.memref_slice %arg5[%c2_i32_335, %c1_i32_336, %c0_i32_339, %c0_i32_340] : memref<4x2x8x128xf32, #tpu.memory_space<vmem>> -> memref<1x1x8x128xf32, #tpu.memory_space<vmem>>
    %519 = tpu.memref_squeeze %518 : memref<1x1x8x128xf32, #tpu.memory_space<vmem>> -> memref<8x128xf32, #tpu.memory_space<vmem>>
    %c0_i32_341 = arith.constant 0 : i32
    %520 = tpu.memref_slice %arg4[%517, %c0_i32_341] : memref<512x128xf32, #tpu.memory_space<any>> -> memref<8x128xf32, #tpu.memory_space<any>>
    %521 = tpu.memref_slice %arg6[%c2_i32_337, %c1_i32_338] : memref<4x2x!tpu.dma_semaphore, #tpu.memory_space<semaphore_mem>> -> memref<1x1x!tpu.dma_semaphore, #tpu.memory_space<semaphore_mem>>
    %522 = tpu.memref_squeeze %521 : memref<1x1x!tpu.dma_semaphore, #tpu.memory_space<semaphore_mem>> -> memref<!tpu.dma_semaphore, #tpu.memory_space<semaphore_mem>>
    tpu.enqueue_dma source(%519 : memref<8x128xf32, #tpu.memory_space<vmem>>) target(%520 : memref<8x128xf32, #tpu.memory_space<any>>) target_semaphore(%522 : memref<!tpu.dma_semaphore, #tpu.memory_space<semaphore_mem>>)
    %c3_i32_342 = arith.constant 3 : i32
    %523 = arith.addi %0, %c3_i32_342 : i32
    %524 = arith.index_cast %523 : i32 to index
    %c0_343 = arith.constant 0 : index
    %525 = memref.load %arg1[%524, %c0_343] : memref<4x2xi32, #tpu.memory_space<smem>>
    %c120_i32_344 = arith.constant 120 : i32
    %526 = arith.minsi %525, %c120_i32_344 : i32
    %c128_i32_345 = arith.constant 128 : i32
    %527 = arith.muli %523, %c128_i32_345 : i32
    %528 = arith.addi %527, %526 : i32
    %c3_i32_346 = arith.constant 3 : i32
    %c0_i32_347 = arith.constant 0 : i32
    %c3_i32_348 = arith.constant 3 : i32
    %c0_i32_349 = arith.constant 0 : i32
    %c0_i32_350 = arith.constant 0 : i32
    %c0_i32_351 = arith.constant 0 : i32
    %529 = tpu.memref_slice %arg5[%c3_i32_346, %c0_i32_347, %c0_i32_350, %c0_i32_351] : memref<4x2x8x128xf32, #tpu.memory_space<vmem>> -> memref<1x1x8x128xf32, #tpu.memory_space<vmem>>
    %530 = tpu.memref_squeeze %529 : memref<1x1x8x128xf32, #tpu.memory_space<vmem>> -> memref<8x128xf32, #tpu.memory_space<vmem>>
    %c0_i32_352 = arith.constant 0 : i32
    %531 = tpu.memref_slice %arg4[%528, %c0_i32_352] : memref<512x128xf32, #tpu.memory_space<any>> -> memref<8x128xf32, #tpu.memory_space<any>>
    %532 = tpu.memref_slice %arg6[%c3_i32_348, %c0_i32_349] : memref<4x2x!tpu.dma_semaphore, #tpu.memory_space<semaphore_mem>> -> memref<1x1x!tpu.dma_semaphore, #tpu.memory_space<semaphore_mem>>
    %533 = tpu.memref_squeeze %532 : memref<1x1x!tpu.dma_semaphore, #tpu.memory_space<semaphore_mem>> -> memref<!tpu.dma_semaphore, #tpu.memory_space<semaphore_mem>>
    tpu.enqueue_dma source(%530 : memref<8x128xf32, #tpu.memory_space<vmem>>) target(%531 : memref<8x128xf32, #tpu.memory_space<any>>) target_semaphore(%533 : memref<!tpu.dma_semaphore, #tpu.memory_space<semaphore_mem>>)
    %c3_i32_353 = arith.constant 3 : i32
    %534 = arith.addi %0, %c3_i32_353 : i32
    %535 = arith.index_cast %534 : i32 to index
    %c1_354 = arith.constant 1 : index
    %536 = memref.load %arg1[%535, %c1_354] : memref<4x2xi32, #tpu.memory_space<smem>>
    %c120_i32_355 = arith.constant 120 : i32
    %537 = arith.minsi %536, %c120_i32_355 : i32
    %c128_i32_356 = arith.constant 128 : i32
    %538 = arith.muli %534, %c128_i32_356 : i32
    %539 = arith.addi %538, %537 : i32
    %c3_i32_357 = arith.constant 3 : i32
    %c1_i32_358 = arith.constant 1 : i32
    %c3_i32_359 = arith.constant 3 : i32
    %c1_i32_360 = arith.constant 1 : i32
    %c0_i32_361 = arith.constant 0 : i32
    %c0_i32_362 = arith.constant 0 : i32
    %540 = tpu.memref_slice %arg5[%c3_i32_357, %c1_i32_358, %c0_i32_361, %c0_i32_362] : memref<4x2x8x128xf32, #tpu.memory_space<vmem>> -> memref<1x1x8x128xf32, #tpu.memory_space<vmem>>
    %541 = tpu.memref_squeeze %540 : memref<1x1x8x128xf32, #tpu.memory_space<vmem>> -> memref<8x128xf32, #tpu.memory_space<vmem>>
    %c0_i32_363 = arith.constant 0 : i32
    %542 = tpu.memref_slice %arg4[%539, %c0_i32_363] : memref<512x128xf32, #tpu.memory_space<any>> -> memref<8x128xf32, #tpu.memory_space<any>>
    %543 = tpu.memref_slice %arg6[%c3_i32_359, %c1_i32_360] : memref<4x2x!tpu.dma_semaphore, #tpu.memory_space<semaphore_mem>> -> memref<1x1x!tpu.dma_semaphore, #tpu.memory_space<semaphore_mem>>
    %544 = tpu.memref_squeeze %543 : memref<1x1x!tpu.dma_semaphore, #tpu.memory_space<semaphore_mem>> -> memref<!tpu.dma_semaphore, #tpu.memory_space<semaphore_mem>>
    tpu.enqueue_dma source(%541 : memref<8x128xf32, #tpu.memory_space<vmem>>) target(%542 : memref<8x128xf32, #tpu.memory_space<any>>) target_semaphore(%544 : memref<!tpu.dma_semaphore, #tpu.memory_space<semaphore_mem>>)
    %c0_i32_364 = arith.constant 0 : i32
    %545 = arith.addi %0, %c0_i32_364 : i32
    %546 = arith.index_cast %545 : i32 to index
    %c0_365 = arith.constant 0 : index
    %547 = memref.load %arg1[%546, %c0_365] : memref<4x2xi32, #tpu.memory_space<smem>>
    %c120_i32_366 = arith.constant 120 : i32
    %548 = arith.minsi %547, %c120_i32_366 : i32
    %c128_i32_367 = arith.constant 128 : i32
    %549 = arith.muli %545, %c128_i32_367 : i32
    %550 = arith.addi %549, %548 : i32
    %c0_i32_368 = arith.constant 0 : i32
    %c0_i32_369 = arith.constant 0 : i32
    %c0_i32_370 = arith.constant 0 : i32
    %c0_i32_371 = arith.constant 0 : i32
    %c0_i32_372 = arith.constant 0 : i32
    %c0_i32_373 = arith.constant 0 : i32
    %551 = tpu.memref_slice %arg5[%c0_i32_368, %c0_i32_369, %c0_i32_372, %c0_i32_373] : memref<4x2x8x128xf32, #tpu.memory_space<vmem>> -> memref<1x1x8x128xf32, #tpu.memory_space<vmem>>
    %552 = tpu.memref_squeeze %551 : memref<1x1x8x128xf32, #tpu.memory_space<vmem>> -> memref<8x128xf32, #tpu.memory_space<vmem>>
    %c0_i32_374 = arith.constant 0 : i32
    %553 = tpu.memref_slice %arg4[%550, %c0_i32_374] : memref<512x128xf32, #tpu.memory_space<any>> -> memref<8x128xf32, #tpu.memory_space<any>>
    %554 = tpu.memref_slice %arg6[%c0_i32_370, %c0_i32_371] : memref<4x2x!tpu.dma_semaphore, #tpu.memory_space<semaphore_mem>> -> memref<1x1x!tpu.dma_semaphore, #tpu.memory_space<semaphore_mem>>
    %555 = tpu.memref_squeeze %554 : memref<1x1x!tpu.dma_semaphore, #tpu.memory_space<semaphore_mem>> -> memref<!tpu.dma_semaphore, #tpu.memory_space<semaphore_mem>>
    tpu.wait_dma2 semaphore(%555 : memref<!tpu.dma_semaphore, #tpu.memory_space<semaphore_mem>>) src(%552 : memref<8x128xf32, #tpu.memory_space<vmem>>) dst(%553 : memref<8x128xf32, #tpu.memory_space<any>>)
    %c0_i32_375 = arith.constant 0 : i32
    %556 = arith.addi %0, %c0_i32_375 : i32
    %557 = arith.index_cast %556 : i32 to index
    %c1_376 = arith.constant 1 : index
    %558 = memref.load %arg1[%557, %c1_376] : memref<4x2xi32, #tpu.memory_space<smem>>
    %c120_i32_377 = arith.constant 120 : i32
    %559 = arith.minsi %558, %c120_i32_377 : i32
    %c128_i32_378 = arith.constant 128 : i32
    %560 = arith.muli %556, %c128_i32_378 : i32
    %561 = arith.addi %560, %559 : i32
    %c0_i32_379 = arith.constant 0 : i32
    %c1_i32_380 = arith.constant 1 : i32
    %c0_i32_381 = arith.constant 0 : i32
    %c1_i32_382 = arith.constant 1 : i32
    %c0_i32_383 = arith.constant 0 : i32
    %c0_i32_384 = arith.constant 0 : i32
    %562 = tpu.memref_slice %arg5[%c0_i32_379, %c1_i32_380, %c0_i32_383, %c0_i32_384] : memref<4x2x8x128xf32, #tpu.memory_space<vmem>> -> memref<1x1x8x128xf32, #tpu.memory_space<vmem>>
    %563 = tpu.memref_squeeze %562 : memref<1x1x8x128xf32, #tpu.memory_space<vmem>> -> memref<8x128xf32, #tpu.memory_space<vmem>>
    %c0_i32_385 = arith.constant 0 : i32
    %564 = tpu.memref_slice %arg4[%561, %c0_i32_385] : memref<512x128xf32, #tpu.memory_space<any>> -> memref<8x128xf32, #tpu.memory_space<any>>
    %565 = tpu.memref_slice %arg6[%c0_i32_381, %c1_i32_382] : memref<4x2x!tpu.dma_semaphore, #tpu.memory_space<semaphore_mem>> -> memref<1x1x!tpu.dma_semaphore, #tpu.memory_space<semaphore_mem>>
    %566 = tpu.memref_squeeze %565 : memref<1x1x!tpu.dma_semaphore, #tpu.memory_space<semaphore_mem>> -> memref<!tpu.dma_semaphore, #tpu.memory_space<semaphore_mem>>
    tpu.wait_dma2 semaphore(%566 : memref<!tpu.dma_semaphore, #tpu.memory_space<semaphore_mem>>) src(%563 : memref<8x128xf32, #tpu.memory_space<vmem>>) dst(%564 : memref<8x128xf32, #tpu.memory_space<any>>)
    %c1_i32_386 = arith.constant 1 : i32
    %567 = arith.addi %0, %c1_i32_386 : i32
    %568 = arith.index_cast %567 : i32 to index
    %c0_387 = arith.constant 0 : index
    %569 = memref.load %arg1[%568, %c0_387] : memref<4x2xi32, #tpu.memory_space<smem>>
    %c120_i32_388 = arith.constant 120 : i32
    %570 = arith.minsi %569, %c120_i32_388 : i32
    %c128_i32_389 = arith.constant 128 : i32
    %571 = arith.muli %567, %c128_i32_389 : i32
    %572 = arith.addi %571, %570 : i32
    %c1_i32_390 = arith.constant 1 : i32
    %c0_i32_391 = arith.constant 0 : i32
    %c1_i32_392 = arith.constant 1 : i32
    %c0_i32_393 = arith.constant 0 : i32
    %c0_i32_394 = arith.constant 0 : i32
    %c0_i32_395 = arith.constant 0 : i32
    %573 = tpu.memref_slice %arg5[%c1_i32_390, %c0_i32_391, %c0_i32_394, %c0_i32_395] : memref<4x2x8x128xf32, #tpu.memory_space<vmem>> -> memref<1x1x8x128xf32, #tpu.memory_space<vmem>>
    %574 = tpu.memref_squeeze %573 : memref<1x1x8x128xf32, #tpu.memory_space<vmem>> -> memref<8x128xf32, #tpu.memory_space<vmem>>
    %c0_i32_396 = arith.constant 0 : i32
    %575 = tpu.memref_slice %arg4[%572, %c0_i32_396] : memref<512x128xf32, #tpu.memory_space<any>> -> memref<8x128xf32, #tpu.memory_space<any>>
    %576 = tpu.memref_slice %arg6[%c1_i32_392, %c0_i32_393] : memref<4x2x!tpu.dma_semaphore, #tpu.memory_space<semaphore_mem>> -> memref<1x1x!tpu.dma_semaphore, #tpu.memory_space<semaphore_mem>>
    %577 = tpu.memref_squeeze %576 : memref<1x1x!tpu.dma_semaphore, #tpu.memory_space<semaphore_mem>> -> memref<!tpu.dma_semaphore, #tpu.memory_space<semaphore_mem>>
    tpu.wait_dma2 semaphore(%577 : memref<!tpu.dma_semaphore, #tpu.memory_space<semaphore_mem>>) src(%574 : memref<8x128xf32, #tpu.memory_space<vmem>>) dst(%575 : memref<8x128xf32, #tpu.memory_space<any>>)
    %c1_i32_397 = arith.constant 1 : i32
    %578 = arith.addi %0, %c1_i32_397 : i32
    %579 = arith.index_cast %578 : i32 to index
    %c1_398 = arith.constant 1 : index
    %580 = memref.load %arg1[%579, %c1_398] : memref<4x2xi32, #tpu.memory_space<smem>>
    %c120_i32_399 = arith.constant 120 : i32
    %581 = arith.minsi %580, %c120_i32_399 : i32
    %c128_i32_400 = arith.constant 128 : i32
    %582 = arith.muli %578, %c128_i32_400 : i32
    %583 = arith.addi %582, %581 : i32
    %c1_i32_401 = arith.constant 1 : i32
    %c1_i32_402 = arith.constant 1 : i32
    %c1_i32_403 = arith.constant 1 : i32
    %c1_i32_404 = arith.constant 1 : i32
    %c0_i32_405 = arith.constant 0 : i32
    %c0_i32_406 = arith.constant 0 : i32
    %584 = tpu.memref_slice %arg5[%c1_i32_401, %c1_i32_402, %c0_i32_405, %c0_i32_406] : memref<4x2x8x128xf32, #tpu.memory_space<vmem>> -> memref<1x1x8x128xf32, #tpu.memory_space<vmem>>
    %585 = tpu.memref_squeeze %584 : memref<1x1x8x128xf32, #tpu.memory_space<vmem>> -> memref<8x128xf32, #tpu.memory_space<vmem>>
    %c0_i32_407 = arith.constant 0 : i32
    %586 = tpu.memref_slice %arg4[%583, %c0_i32_407] : memref<512x128xf32, #tpu.memory_space<any>> -> memref<8x128xf32, #tpu.memory_space<any>>
    %587 = tpu.memref_slice %arg6[%c1_i32_403, %c1_i32_404] : memref<4x2x!tpu.dma_semaphore, #tpu.memory_space<semaphore_mem>> -> memref<1x1x!tpu.dma_semaphore, #tpu.memory_space<semaphore_mem>>
    %588 = tpu.memref_squeeze %587 : memref<1x1x!tpu.dma_semaphore, #tpu.memory_space<semaphore_mem>> -> memref<!tpu.dma_semaphore, #tpu.memory_space<semaphore_mem>>
    tpu.wait_dma2 semaphore(%588 : memref<!tpu.dma_semaphore, #tpu.memory_space<semaphore_mem>>) src(%585 : memref<8x128xf32, #tpu.memory_space<vmem>>) dst(%586 : memref<8x128xf32, #tpu.memory_space<any>>)
    %c2_i32_408 = arith.constant 2 : i32
    %589 = arith.addi %0, %c2_i32_408 : i32
    %590 = arith.index_cast %589 : i32 to index
    %c0_409 = arith.constant 0 : index
    %591 = memref.load %arg1[%590, %c0_409] : memref<4x2xi32, #tpu.memory_space<smem>>
    %c120_i32_410 = arith.constant 120 : i32
    %592 = arith.minsi %591, %c120_i32_410 : i32
    %c128_i32_411 = arith.constant 128 : i32
    %593 = arith.muli %589, %c128_i32_411 : i32
    %594 = arith.addi %593, %592 : i32
    %c2_i32_412 = arith.constant 2 : i32
    %c0_i32_413 = arith.constant 0 : i32
    %c2_i32_414 = arith.constant 2 : i32
    %c0_i32_415 = arith.constant 0 : i32
    %c0_i32_416 = arith.constant 0 : i32
    %c0_i32_417 = arith.constant 0 : i32
    %595 = tpu.memref_slice %arg5[%c2_i32_412, %c0_i32_413, %c0_i32_416, %c0_i32_417] : memref<4x2x8x128xf32, #tpu.memory_space<vmem>> -> memref<1x1x8x128xf32, #tpu.memory_space<vmem>>
    %596 = tpu.memref_squeeze %595 : memref<1x1x8x128xf32, #tpu.memory_space<vmem>> -> memref<8x128xf32, #tpu.memory_space<vmem>>
    %c0_i32_418 = arith.constant 0 : i32
    %597 = tpu.memref_slice %arg4[%594, %c0_i32_418] : memref<512x128xf32, #tpu.memory_space<any>> -> memref<8x128xf32, #tpu.memory_space<any>>
    %598 = tpu.memref_slice %arg6[%c2_i32_414, %c0_i32_415] : memref<4x2x!tpu.dma_semaphore, #tpu.memory_space<semaphore_mem>> -> memref<1x1x!tpu.dma_semaphore, #tpu.memory_space<semaphore_mem>>
    %599 = tpu.memref_squeeze %598 : memref<1x1x!tpu.dma_semaphore, #tpu.memory_space<semaphore_mem>> -> memref<!tpu.dma_semaphore, #tpu.memory_space<semaphore_mem>>
    tpu.wait_dma2 semaphore(%599 : memref<!tpu.dma_semaphore, #tpu.memory_space<semaphore_mem>>) src(%596 : memref<8x128xf32, #tpu.memory_space<vmem>>) dst(%597 : memref<8x128xf32, #tpu.memory_space<any>>)
    %c2_i32_419 = arith.constant 2 : i32
    %600 = arith.addi %0, %c2_i32_419 : i32
    %601 = arith.index_cast %600 : i32 to index
    %c1_420 = arith.constant 1 : index
    %602 = memref.load %arg1[%601, %c1_420] : memref<4x2xi32, #tpu.memory_space<smem>>
    %c120_i32_421 = arith.constant 120 : i32
    %603 = arith.minsi %602, %c120_i32_421 : i32
    %c128_i32_422 = arith.constant 128 : i32
    %604 = arith.muli %600, %c128_i32_422 : i32
    %605 = arith.addi %604, %603 : i32
    %c2_i32_423 = arith.constant 2 : i32
    %c1_i32_424 = arith.constant 1 : i32
    %c2_i32_425 = arith.constant 2 : i32
    %c1_i32_426 = arith.constant 1 : i32
    %c0_i32_427 = arith.constant 0 : i32
    %c0_i32_428 = arith.constant 0 : i32
    %606 = tpu.memref_slice %arg5[%c2_i32_423, %c1_i32_424, %c0_i32_427, %c0_i32_428] : memref<4x2x8x128xf32, #tpu.memory_space<vmem>> -> memref<1x1x8x128xf32, #tpu.memory_space<vmem>>
    %607 = tpu.memref_squeeze %606 : memref<1x1x8x128xf32, #tpu.memory_space<vmem>> -> memref<8x128xf32, #tpu.memory_space<vmem>>
    %c0_i32_429 = arith.constant 0 : i32
    %608 = tpu.memref_slice %arg4[%605, %c0_i32_429] : memref<512x128xf32, #tpu.memory_space<any>> -> memref<8x128xf32, #tpu.memory_space<any>>
    %609 = tpu.memref_slice %arg6[%c2_i32_425, %c1_i32_426] : memref<4x2x!tpu.dma_semaphore, #tpu.memory_space<semaphore_mem>> -> memref<1x1x!tpu.dma_semaphore, #tpu.memory_space<semaphore_mem>>
    %610 = tpu.memref_squeeze %609 : memref<1x1x!tpu.dma_semaphore, #tpu.memory_space<semaphore_mem>> -> memref<!tpu.dma_semaphore, #tpu.memory_space<semaphore_mem>>
    tpu.wait_dma2 semaphore(%610 : memref<!tpu.dma_semaphore, #tpu.memory_space<semaphore_mem>>) src(%607 : memref<8x128xf32, #tpu.memory_space<vmem>>) dst(%608 : memref<8x128xf32, #tpu.memory_space<any>>)
    %c3_i32_430 = arith.constant 3 : i32
    %611 = arith.addi %0, %c3_i32_430 : i32
    %612 = arith.index_cast %611 : i32 to index
    %c0_431 = arith.constant 0 : index
    %613 = memref.load %arg1[%612, %c0_431] : memref<4x2xi32, #tpu.memory_space<smem>>
    %c120_i32_432 = arith.constant 120 : i32
    %614 = arith.minsi %613, %c120_i32_432 : i32
    %c128_i32_433 = arith.constant 128 : i32
    %615 = arith.muli %611, %c128_i32_433 : i32
    %616 = arith.addi %615, %614 : i32
    %c3_i32_434 = arith.constant 3 : i32
    %c0_i32_435 = arith.constant 0 : i32
    %c3_i32_436 = arith.constant 3 : i32
    %c0_i32_437 = arith.constant 0 : i32
    %c0_i32_438 = arith.constant 0 : i32
    %c0_i32_439 = arith.constant 0 : i32
    %617 = tpu.memref_slice %arg5[%c3_i32_434, %c0_i32_435, %c0_i32_438, %c0_i32_439] : memref<4x2x8x128xf32, #tpu.memory_space<vmem>> -> memref<1x1x8x128xf32, #tpu.memory_space<vmem>>
    %618 = tpu.memref_squeeze %617 : memref<1x1x8x128xf32, #tpu.memory_space<vmem>> -> memref<8x128xf32, #tpu.memory_space<vmem>>
    %c0_i32_440 = arith.constant 0 : i32
    %619 = tpu.memref_slice %arg4[%616, %c0_i32_440] : memref<512x128xf32, #tpu.memory_space<any>> -> memref<8x128xf32, #tpu.memory_space<any>>
    %620 = tpu.memref_slice %arg6[%c3_i32_436, %c0_i32_437] : memref<4x2x!tpu.dma_semaphore, #tpu.memory_space<semaphore_mem>> -> memref<1x1x!tpu.dma_semaphore, #tpu.memory_space<semaphore_mem>>
    %621 = tpu.memref_squeeze %620 : memref<1x1x!tpu.dma_semaphore, #tpu.memory_space<semaphore_mem>> -> memref<!tpu.dma_semaphore, #tpu.memory_space<semaphore_mem>>
    tpu.wait_dma2 semaphore(%621 : memref<!tpu.dma_semaphore, #tpu.memory_space<semaphore_mem>>) src(%618 : memref<8x128xf32, #tpu.memory_space<vmem>>) dst(%619 : memref<8x128xf32, #tpu.memory_space<any>>)
    %c3_i32_441 = arith.constant 3 : i32
    %622 = arith.addi %0, %c3_i32_441 : i32
    %623 = arith.index_cast %622 : i32 to index
    %c1_442 = arith.constant 1 : index
    %624 = memref.load %arg1[%623, %c1_442] : memref<4x2xi32, #tpu.memory_space<smem>>
    %c120_i32_443 = arith.constant 120 : i32
    %625 = arith.minsi %624, %c120_i32_443 : i32
    %c128_i32_444 = arith.constant 128 : i32
    %626 = arith.muli %622, %c128_i32_444 : i32
    %627 = arith.addi %626, %625 : i32
    %c3_i32_445 = arith.constant 3 : i32
    %c1_i32_446 = arith.constant 1 : i32
    %c3_i32_447 = arith.constant 3 : i32
    %c1_i32_448 = arith.constant 1 : i32
    %c0_i32_449 = arith.constant 0 : i32
    %c0_i32_450 = arith.constant 0 : i32
    %628 = tpu.memref_slice %arg5[%c3_i32_445, %c1_i32_446, %c0_i32_449, %c0_i32_450] : memref<4x2x8x128xf32, #tpu.memory_space<vmem>> -> memref<1x1x8x128xf32, #tpu.memory_space<vmem>>
    %629 = tpu.memref_squeeze %628 : memref<1x1x8x128xf32, #tpu.memory_space<vmem>> -> memref<8x128xf32, #tpu.memory_space<vmem>>
    %c0_i32_451 = arith.constant 0 : i32
    %630 = tpu.memref_slice %arg4[%627, %c0_i32_451] : memref<512x128xf32, #tpu.memory_space<any>> -> memref<8x128xf32, #tpu.memory_space<any>>
    %631 = tpu.memref_slice %arg6[%c3_i32_447, %c1_i32_448] : memref<4x2x!tpu.dma_semaphore, #tpu.memory_space<semaphore_mem>> -> memref<1x1x!tpu.dma_semaphore, #tpu.memory_space<semaphore_mem>>
    %632 = tpu.memref_squeeze %631 : memref<1x1x!tpu.dma_semaphore, #tpu.memory_space<semaphore_mem>> -> memref<!tpu.dma_semaphore, #tpu.memory_space<semaphore_mem>>
    tpu.wait_dma2 semaphore(%632 : memref<!tpu.dma_semaphore, #tpu.memory_space<semaphore_mem>>) src(%629 : memref<8x128xf32, #tpu.memory_space<vmem>>) dst(%630 : memref<8x128xf32, #tpu.memory_space<any>>)
    return
  }
  func.func @transform_0(%arg0: i32) -> (i32, i32) {
    %c0_i32 = arith.constant 0 : i32
    %c0_i32_0 = arith.constant 0 : i32
    %c0_i32_1 = arith.constant 0 : i32
    return %c0_i32, %c0_i32_0 : i32, i32
  }
  func.func @transform_1(%arg0: i32) -> (i32, i32) {
    %c0_i32 = arith.constant 0 : i32
    %c0_i32_0 = arith.constant 0 : i32
    %c0_i32_1 = arith.constant 0 : i32
    return %c0_i32, %c0_i32_0 : i32, i32
  }
}

</mosaic_0001>

<llo_original>
// kernel: tpu_custom_call.1
$region0: #{tpu_custom_call.1}
  #allocation0 [shape = 'u32[]', space=smem, size = 0x4, offset = 0x4, fixed_abs, tag = 'smem constant byte address 0x4 - core index']
  #allocation1 [shape = 'u32[144,128]{1,0:T(1,128)}', space=vmem, size = 0x12000, scoped, tag = 'internal scratch']
  #allocation2 [shape = 'f32[4,2,8,128]{3,2,1,0:T(8,128)}', space=vmem, size = 0x8000, scoped, tag = 'scratch operand']
  #allocation3 [shape = 's32[8]{0}', space=sflag, size = 0x20, scoped, tag = 'scratch operand']
  #allocation8 [shape = 's32[]', space=sflag, size = 0x4, offset = 0, fixed_abs, tag = 'sflag constant byte address 0x0 - dummy sync flag']
  #allocation9 [shape = 's32[]', space=sflag, size = 0x4, offset = 0, fixed_abs, tag = 'sflag constant byte address 0x0 - dummy sync flag']
  #allocation10 [shape = 'u32[]', space=smem, size = 0x4, offset = 0x44, fixed_abs, tag = 'smem constant byte address 0x44 - assertion arg 0']
  #allocation11 [shape = 'u32[]', space=smem, size = 0x4, offset = 0x48, fixed_abs, tag = 'smem constant byte address 0x48 - assertion arg 1']
  #allocation12 [shape = 's32[]', space=sflag, size = 0x4, offset = 0, fixed_abs, tag = 'sflag constant byte address 0x0 - dummy sync flag']
  #allocation13 [shape = 's32[]', space=sflag, size = 0x4, offset = 0, fixed_abs, tag = 'sflag constant byte address 0x0 - dummy sync flag']
  #allocation14 [shape = 's32[]', space=sflag, size = 0x4, offset = 0, fixed_abs, tag = 'sflag constant byte address 0x0 - dummy sync flag']
  #allocation15 [shape = 's32[]', space=sflag, size = 0x4, offset = 0, fixed_abs, tag = 'sflag constant byte address 0x0 - dummy sync flag']
  #allocation16 [shape = 's32[]', space=sflag, size = 0x4, offset = 0, fixed_abs, tag = 'sflag constant byte address 0x0 - dummy sync flag']
  #allocation17 [shape = 's32[]', space=sflag, size = 0x4, offset = 0, fixed_abs, tag = 'sflag constant byte address 0x0 - dummy sync flag']
  #allocation18 [shape = 's32[]', space=sflag, size = 0x4, offset = 0, fixed_abs, tag = 'sflag constant byte address 0x0 - dummy sync flag']
  #allocation19 [shape = 's32[]', space=sflag, size = 0x4, offset = 0, fixed_abs, tag = 'sflag constant byte address 0x0 - dummy sync flag']
  #allocation20 [shape = 's32[]', space=sflag, size = 0x4, offset = 0, fixed_abs, tag = 'sflag constant byte address 0x0 - dummy sync flag']
  #allocation21 [shape = 's32[]', space=sflag, size = 0x4, offset = 0, fixed_abs, tag = 'sflag constant byte address 0x0 - dummy sync flag']
  #allocation22 [shape = 's32[]', space=sflag, size = 0x4, offset = 0, fixed_abs, tag = 'sflag constant byte address 0x0 - dummy sync flag']
  #allocation23 [shape = 's32[]', space=sflag, size = 0x4, offset = 0, fixed_abs, tag = 'sflag constant byte address 0x0 - dummy sync flag']
  #allocation24 [shape = 's32[]', space=sflag, size = 0x4, offset = 0, fixed_abs, tag = 'sflag constant byte address 0x0 - dummy sync flag']
  #allocation25 [shape = 's32[]', space=sflag, size = 0x4, offset = 0, fixed_abs, tag = 'sflag constant byte address 0x0 - dummy sync flag']
  #allocation26 [shape = 's32[]', space=sflag, size = 0x4, offset = 0, fixed_abs, tag = 'sflag constant byte address 0x0 - dummy sync flag']
  #allocation27 [shape = 's32[]', space=sflag, size = 0x4, offset = 0, fixed_abs, tag = 'sflag constant byte address 0x0 - dummy sync flag']
  #allocation28 [shape = 's32[]', space=sflag, size = 0x4, offset = 0, fixed_abs, tag = 'sflag constant byte address 0x0 - dummy sync flag']
  #allocation29 [shape = 's32[]', space=sflag, size = 0x4, offset = 0, fixed_abs, tag = 'sflag constant byte address 0x0 - dummy sync flag']
  #allocation30 [shape = 's32[]', space=sflag, size = 0x4, offset = 0, fixed_abs, tag = 'sflag constant byte address 0x0 - dummy sync flag']
  #allocation31 [shape = 's32[]', space=sflag, size = 0x4, offset = 0, fixed_abs, tag = 'sflag constant byte address 0x0 - dummy sync flag']
  #allocation32 [shape = 's32[]', space=sflag, size = 0x4, offset = 0, fixed_abs, tag = 'sflag constant byte address 0x0 - dummy sync flag']
  #allocation33 [shape = 's32[]', space=sflag, size = 0x4, offset = 0, fixed_abs, tag = 'sflag constant byte address 0x0 - dummy sync flag']
  #allocation34 [shape = 's32[]', space=sflag, size = 0x4, offset = 0, fixed_abs, tag = 'sflag constant byte address 0x0 - dummy sync flag']
  #allocation35 [shape = 's32[]', space=sflag, size = 0x4, offset = 0, fixed_abs, tag = 'sflag constant byte address 0x0 - dummy sync flag']
  #allocation36 [shape = 's32[]', space=sflag, size = 0x4, offset = 0, fixed_abs, tag = 'sflag constant byte address 0x0 - dummy sync flag']
  #allocation37 [shape = 's32[]', space=sflag, size = 0x4, offset = 0, fixed_abs, tag = 'sflag constant byte address 0x0 - dummy sync flag']
  #allocation38 [shape = 's32[]', space=sflag, size = 0x4, offset = 0, fixed_abs, tag = 'sflag constant byte address 0x0 - dummy sync flag']
  #allocation39 [shape = 's32[]', space=sflag, size = 0x4, offset = 0, fixed_abs, tag = 'sflag constant byte address 0x0 - dummy sync flag']
  #allocation40 [shape = 's32[]', space=sflag, size = 0x4, offset = 0, fixed_abs, tag = 'sflag constant byte address 0x0 - dummy sync flag']
  #allocation41 [shape = 's32[]', space=sflag, size = 0x4, offset = 0, fixed_abs, tag = 'sflag constant byte address 0x0 - dummy sync flag']
  %s0 = inlined_call_operand.vmem [shape: s32[4,2], index: 0, kind: input, shape index: {}]
  %s1 = inlined_call_operand.vmem [shape: s32[4,2], index: 1, kind: input, shape index: {}]
  %s2 = inlined_call_operand.hbm [shape: f32[512,128], index: 2, kind: input, shape index: {}, may-alias: {2,3}]
  %s3 = inlined_call_operand.hbm [shape: f32[512,128], index: 3, kind: output, shape index: {}, may-alias: {2,3}]
  %s4 = sld [smem:[#allocation0]]
  $region82: #{tpu_custom_call.1} parent=0
    _
  %s6 = ssub.s32 1, %s4
  %s7 = scalar_select 0, %s6, %s4
  $region1: #{tpu_custom_call.1} parent=0
    #allocation4 [shape = 'u8[2048]{0}', space=smem, size = 0x800, scoped, tag = 'input window, operand 0, single buffered']
    #allocation5 [shape = 's32[1]{0}', space=sflag, size = 0x4, scoped, tag = 'scoped memory for tpu_custom_call.1']
    #allocation6 [shape = 'u8[2048]{0}', space=smem, size = 0x800, scoped, tag = 'input window, operand 1, single buffered']
    #allocation7 [shape = 's32[1]{0}', space=sflag, size = 0x4, scoped, tag = 'scoped memory for tpu_custom_call.1']
    %8 = vsyncpa [#allocation5], 0
    %9 = vsyncpa [#allocation7], 0
    // Predicated region
    $region2: #{tpu_custom_call.1} parent=1 // pred_check
      _
    $region3: #{tpu_custom_call.1} parent=1 // pred_check_branch
      %11 = sbr.rel (0) target = $region5
    $region4: #{tpu_custom_call.1} parent=1 // pred_region
      %s13 = ssub.s32 64, 64
      %14 = vsyncadd [#allocation5], %s13
      %s16 = sshll.u32 %s0, 4
      %s17 = int_to_ptr.vmem [resolvable:$true] %s16
      %19 = dma.vmem_to_smem %s17, 64, [#allocation4], [#allocation5]
    $region5: #{tpu_custom_call.1} parent=1 // pred_fallthru
      _
    // Predicated region
    $region6: #{tpu_custom_call.1} parent=1 // pred_check
      _
    $region7: #{tpu_custom_call.1} parent=1 // pred_check_branch
      %21 = sbr.rel (0) target = $region9
    $region8: #{tpu_custom_call.1} parent=1 // pred_region
      %s23 = ssub.s32 64, 64
      %24 = vsyncadd [#allocation7], %s23
      %s26 = sshll.u32 %s1, 4
      %s27 = int_to_ptr.vmem [resolvable:$true] %s26
      %29 = dma.vmem_to_smem %s27, 64, [#allocation6], [#allocation7]
    $region9: #{tpu_custom_call.1} parent=1 // pred_fallthru
      _
    // Predicated region
    $region10: #{tpu_custom_call.1} parent=1 // pred_check
      _
    $region11: #{tpu_custom_call.1} parent=1 // pred_check_branch
      %31 = sbr.rel (0) target = $region13
    $region12: #{tpu_custom_call.1} parent=1 // pred_region
      %32 = dma.done [#allocation5], 64
    $region13: #{tpu_custom_call.1} parent=1 // pred_fallthru
      _
    // Predicated region
    $region14: #{tpu_custom_call.1} parent=1 // pred_check
      _
    $region15: #{tpu_custom_call.1} parent=1 // pred_check_branch
      %34 = sbr.rel (0) target = $region17
    $region16: #{tpu_custom_call.1} parent=1 // pred_region
      %35 = dma.done [#allocation7], 64
    $region17: #{tpu_custom_call.1} parent=1 // pred_fallthru
      _
    %36 = sfence
    %s37 = smul.u32 0, 4
    %s38 = smul.u32 %s37, 128
    %s39 = sld [smem:[#allocation4 + %s38]]
    %p40 = scmp.lt.s32.totalorder %s39, 120
    %s41 = scalar_select %p40, %s39, 120
    %s42 = smul.u32 0, 512
    %s43 = sadd.s32 %s42, %s41
    %s44 = smul.addr %s43, 16
    %s45 = scalar_lea.hbm %s2, %s44
    // Predicated region
    $region18: #{tpu_custom_call.1} parent=1 // pred_check
      _
    $region19: #{tpu_custom_call.1} parent=1 // pred_check_branch
      %47 = sbr.rel target = $region21
    $region20: #{tpu_custom_call.1} parent=1 // pred_region
      %48 = sst [smem:[#allocation10]] [#allocation9]
      %49 = sst [smem:[#allocation11]] [#allocation8]
    $region21: #{tpu_custom_call.1} parent=1 // pred_fallthru
      _
    %51 = shalt.err (0)
    %s53 = sshll.u32 [#allocation2], 4
    %s54 = int_to_ptr.vmem [resolvable:$true] %s53
    %56 = dma.hbm_to_vmem [thread:$0]  %s45, 128, %s54, [#allocation3]
    %s57 = sadd.s32 %s38, 1
    %s58 = sld [smem:[#allocation4 + %s57]]
    %p59 = scmp.lt.s32.totalorder %s58, 120
    %s60 = scalar_select %p59, %s58, 120
    %s61 = sadd.s32 %s42, %s60
    %s62 = smul.addr %s61, 16
    %s63 = scalar_lea.hbm %s2, %s62
    %s64 = scalar_lea.vmem [#allocation2], 8
    %s65 = scalar_lea.sflag [#allocation3], 1
    // Predicated region
    $region22: #{tpu_custom_call.1} parent=1 // pred_check
      _
    $region23: #{tpu_custom_call.1} parent=1 // pred_check_branch
      %67 = sbr.rel target = $region25
    $region24: #{tpu_custom_call.1} parent=1 // pred_region
      %68 = sst [smem:[#allocation10]] [#allocation13]
      %69 = sst [smem:[#allocation11]] [#allocation12]
    $region25: #{tpu_custom_call.1} parent=1 // pred_fallthru
      _
    %71 = shalt.err (0)
    %s73 = sshll.u32 %s64, 4
    %s74 = int_to_ptr.vmem [resolvable:$true] %s73
    %76 = dma.hbm_to_vmem [thread:$0]  %s63, 128, %s74, %s65
    %s77 = sadd.s32 %s37, 1
    %s78 = smul.u32 %s77, 128
    %s79 = sld [smem:[#allocation4 + %s78]]
    %p80 = scmp.lt.s32.totalorder %s79, 120
    %s81 = scalar_select %p80, %s79, 120
    %s82 = sadd.s32 %s78, %s81
    %s83 = smul.addr %s82, 16
    %s84 = scalar_lea.hbm %s2, %s83
    %s85 = scalar_lea.vmem [#allocation2], 16
    %s86 = scalar_lea.sflag [#allocation3], 2
    // Predicated region
    $region26: #{tpu_custom_call.1} parent=1 // pred_check
      _
    $region27: #{tpu_custom_call.1} parent=1 // pred_check_branch
      %88 = sbr.rel target = $region29
    $region28: #{tpu_custom_call.1} parent=1 // pred_region
      %89 = sst [smem:[#allocation10]] [#allocation15]
      %90 = sst [smem:[#allocation11]] [#allocation14]
    $region29: #{tpu_custom_call.1} parent=1 // pred_fallthru
      _
    %92 = shalt.err (0)
    %s94 = sshll.u32 %s85, 4
    %s95 = int_to_ptr.vmem [resolvable:$true] %s94
    %97 = dma.hbm_to_vmem [thread:$0]  %s84, 128, %s95, %s86
    %s98 = sadd.s32 %s78, 1
    %s99 = sld [smem:[#allocation4 + %s98]]
    %p100 = scmp.lt.s32.totalorder %s99, 120
    %s101 = scalar_select %p100, %s99, 120
    %s102 = sadd.s32 %s78, %s101
    %s103 = smul.addr %s102, 16
    %s104 = scalar_lea.hbm %s2, %s103
    %s105 = scalar_lea.vmem [#allocation2], 24
    %s106 = scalar_lea.sflag [#allocation3], 3
    // Predicated region
    $region30: #{tpu_custom_call.1} parent=1 // pred_check
      _
    $region31: #{tpu_custom_call.1} parent=1 // pred_check_branch
      %108 = sbr.rel target = $region33
    $region32: #{tpu_custom_call.1} parent=1 // pred_region
      %109 = sst [smem:[#allocation10]] [#allocation17]
      %110 = sst [smem:[#allocation11]] [#allocation16]
    $region33: #{tpu_custom_call.1} parent=1 // pred_fallthru
      _
    %112 = shalt.err (0)
    %s114 = sshll.u32 %s105, 4
    %s115 = int_to_ptr.vmem [resolvable:$true] %s114
    %117 = dma.hbm_to_vmem [thread:$0]  %s104, 128, %s115, %s106
    %s118 = sadd.s32 %s37, 2
    %s119 = smul.u32 %s118, 128
    %s120 = sld [smem:[#allocation4 + %s119]]
    %p121 = scmp.lt.s32.totalorder %s120, 120
    %s122 = scalar_select %p121, %s120, 120
    %s123 = sadd.s32 %s119, %s122
    %s124 = smul.addr %s123, 16
    %s125 = scalar_lea.hbm %s2, %s124
    %s126 = scalar_lea.vmem [#allocation2], 32
    %s127 = scalar_lea.sflag [#allocation3], 4
    // Predicated region
    $region34: #{tpu_custom_call.1} parent=1 // pred_check
      _
    $region35: #{tpu_custom_call.1} parent=1 // pred_check_branch
      %129 = sbr.rel target = $region37
    $region36: #{tpu_custom_call.1} parent=1 // pred_region
      %130 = sst [smem:[#allocation10]] [#allocation19]
      %131 = sst [smem:[#allocation11]] [#allocation18]
    $region37: #{tpu_custom_call.1} parent=1 // pred_fallthru
      _
    %133 = shalt.err (0)
    %s135 = sshll.u32 %s126, 4
    %s136 = int_to_ptr.vmem [resolvable:$true] %s135
    %138 = dma.hbm_to_vmem [thread:$0]  %s125, 128, %s136, %s127
    %s139 = sadd.s32 %s119, 1
    %s140 = sld [smem:[#allocation4 + %s139]]
    %p141 = scmp.lt.s32.totalorder %s140, 120
    %s142 = scalar_select %p141, %s140, 120
    %s143 = sadd.s32 %s119, %s142
    %s144 = smul.addr %s143, 16
    %s145 = scalar_lea.hbm %s2, %s144
    %s146 = scalar_lea.vmem [#allocation2], 40
    %s147 = scalar_lea.sflag [#allocation3], 5
    // Predicated region
    $region38: #{tpu_custom_call.1} parent=1 // pred_check
      _
    $region39: #{tpu_custom_call.1} parent=1 // pred_check_branch
      %149 = sbr.rel target = $region41
    $region40: #{tpu_custom_call.1} parent=1 // pred_region
      %150 = sst [smem:[#allocation10]] [#allocation21]
      %151 = sst [smem:[#allocation11]] [#allocation20]
    $region41: #{tpu_custom_call.1} parent=1 // pred_fallthru
      _
    %153 = shalt.err (0)
    %s155 = sshll.u32 %s146, 4
    %s156 = int_to_ptr.vmem [resolvable:$true] %s155
    %158 = dma.hbm_to_vmem [thread:$0]  %s145, 128, %s156, %s147
    %s159 = sadd.s32 %s37, 3
    %s160 = smul.u32 %s159, 128
    %s161 = sld [smem:[#allocation4 + %s160]]
    %p162 = scmp.lt.s32.totalorder %s161, 120
    %s163 = scalar_select %p162, %s161, 120
    %s164 = sadd.s32 %s160, %s163
    %s165 = smul.addr %s164, 16
    %s166 = scalar_lea.hbm %s2, %s165
    %s167 = scalar_lea.vmem [#allocation2], 48
    %s168 = scalar_lea.sflag [#allocation3], 6
    // Predicated region
    $region42: #{tpu_custom_call.1} parent=1 // pred_check
      _
    $region43: #{tpu_custom_call.1} parent=1 // pred_check_branch
      %170 = sbr.rel target = $region45
    $region44: #{tpu_custom_call.1} parent=1 // pred_region
      %171 = sst [smem:[#allocation10]] [#allocation23]
      %172 = sst [smem:[#allocation11]] [#allocation22]
    $region45: #{tpu_custom_call.1} parent=1 // pred_fallthru
      _
    %174 = shalt.err (0)
    %s176 = sshll.u32 %s167, 4
    %s177 = int_to_ptr.vmem [resolvable:$true] %s176
    %179 = dma.hbm_to_vmem [thread:$0]  %s166, 128, %s177, %s168
    %s180 = sadd.s32 %s160, 1
    %s181 = sld [smem:[#allocation4 + %s180]]
    %p182 = scmp.lt.s32.totalorder %s181, 120
    %s183 = scalar_select %p182, %s181, 120
    %s184 = sadd.s32 %s160, %s183
    %s185 = smul.addr %s184, 16
    %s186 = scalar_lea.hbm %s2, %s185
    %s187 = scalar_lea.vmem [#allocation2], 56
    %s188 = scalar_lea.sflag [#allocation3], 7
    // Predicated region
    $region46: #{tpu_custom_call.1} parent=1 // pred_check
      _
    $region47: #{tpu_custom_call.1} parent=1 // pred_check_branch
      %190 = sbr.rel target = $region49
    $region48: #{tpu_custom_call.1} parent=1 // pred_region
      %191 = sst [smem:[#allocation10]] [#allocation25]
      %192 = sst [smem:[#allocation11]] [#allocation24]
    $region49: #{tpu_custom_call.1} parent=1 // pred_fallthru
      _
    %194 = shalt.err (0)
    %s196 = sshll.u32 %s187, 4
    %s197 = int_to_ptr.vmem [resolvable:$true] %s196
    %199 = dma.hbm_to_vmem [thread:$0]  %s186, 128, %s197, %s188
    %s200 = sld [smem:[#allocation4 + %s38]]
    %p201 = scmp.lt.s32.totalorder %s200, 120
    %s202 = scalar_select %p201, %s200, 120
    %s203 = smul.u32 8, 1
    %s204 = sshll.u32 %s203, 4
    %205 = dma.done [#allocation3], %s204
    %v206 = vlaneseq
    %v207 = vshrl.u32 %v206, 7
    %v208 = vstv %s202
    %v209 = vadd.s32 %v208, %v207
    %s210 = sld [smem:[#allocation4 + %s38]]
    %s211 = sld [smem:[#allocation6 + %s38]]
    %s212 = sadd.s32 %s210, %s211
    %v213 = vstv %s210
    %vm214 = vcmp.le.s32.totalorder %v213, %v209
    %v215 = vstv %s212
    %vm216 = vcmp.lt.s32.totalorder %v209, %v215
    %vm217 = vmand %vm214, %vm216
    %s218 = sld [smem:[#allocation4 + %s57]]
    %s219 = sld [smem:[#allocation6 + %s57]]
    %s220 = sadd.s32 %s218, %s219
    %v221 = vstv %s218
    %vm222 = vcmp.le.s32.totalorder %v221, %v209
    %v223 = vstv %s220
    %vm224 = vcmp.lt.s32.totalorder %v209, %v223
    %vm225 = vmand %vm222, %vm224
    %vm226 = vmor %vm217, %vm225
    %v227 = vld [vmem:[#allocation2] sm:$0xff]
    %v228 = vsel %vm226, 1, 0
    %vm229 = vcmp.eq.s32.totalorder %v228, 1
    %v230 = vsel %vm229, 0.0, %v227
    %231 = vst [vmem:[#allocation2] sm:$0xff] %v230
    %s232 = sld [smem:[#allocation4 + %s57]]
    %p233 = scmp.lt.s32.totalorder %s232, 120
    %s234 = scalar_select %p233, %s232, 120
    %s235 = sshll.u32 %s203, 4
    %236 = dma.done %s65, %s235
    %v237 = vstv %s234
    %v238 = vadd.s32 %v237, %v207
    %s239 = sld [smem:[#allocation4 + %s38]]
    %s240 = sld [smem:[#allocation6 + %s38]]
    %s241 = sadd.s32 %s239, %s240
    %v242 = vstv %s239
    %vm243 = vcmp.le.s32.totalorder %v242, %v238
    %v244 = vstv %s241
    %vm245 = vcmp.lt.s32.totalorder %v238, %v244
    %vm246 = vmand %vm243, %vm245
    %s247 = sld [smem:[#allocation4 + %s57]]
    %s248 = sld [smem:[#allocation6 + %s57]]
    %s249 = sadd.s32 %s247, %s248
    %v250 = vstv %s247
    %vm251 = vcmp.le.s32.totalorder %v250, %v238
    %v252 = vstv %s249
    %vm253 = vcmp.lt.s32.totalorder %v238, %v252
    %vm254 = vmand %vm251, %vm253
    %vm255 = vmor %vm246, %vm254
    %v256 = vld [vmem:[%s64] sm:$0xff]
    %v257 = vsel %vm255, 1, 0
    %vm258 = vcmp.eq.s32.totalorder %v257, 1
    %v259 = vsel %vm258, 0.0, %v256
    %260 = vst [vmem:[%s64] sm:$0xff] %v259
    %s261 = sld [smem:[#allocation4 + %s78]]
    %p262 = scmp.lt.s32.totalorder %s261, 120
    %s263 = scalar_select %p262, %s261, 120
    %s264 = sshll.u32 %s203, 4
    %265 = dma.done %s86, %s264
    %v266 = vstv %s263
    %v267 = vadd.s32 %v266, %v207
    %s268 = sld [smem:[#allocation4 + %s78]]
    %s269 = sld [smem:[#allocation6 + %s78]]
    %s270 = sadd.s32 %s268, %s269
    %v271 = vstv %s268
    %vm272 = vcmp.le.s32.totalorder %v271, %v267
    %v273 = vstv %s270
    %vm274 = vcmp.lt.s32.totalorder %v267, %v273
    %vm275 = vmand %vm272, %vm274
    %s276 = sld [smem:[#allocation4 + %s98]]
    %s277 = sld [smem:[#allocation6 + %s98]]
    %s278 = sadd.s32 %s276, %s277
    %v279 = vstv %s276
    %vm280 = vcmp.le.s32.totalorder %v279, %v267
    %v281 = vstv %s278
    %vm282 = vcmp.lt.s32.totalorder %v267, %v281
    %vm283 = vmand %vm280, %vm282
    %vm284 = vmor %vm275, %vm283
    %v285 = vld [vmem:[%s85] sm:$0xff]
    %v286 = vsel %vm284, 1, 0
    %vm287 = vcmp.eq.s32.totalorder %v286, 1
    %v288 = vsel %vm287, 0.0, %v285
    %289 = vst [vmem:[%s85] sm:$0xff] %v288
    %s290 = sld [smem:[#allocation4 + %s98]]
    %p291 = scmp.lt.s32.totalorder %s290, 120
    %s292 = scalar_select %p291, %s290, 120
    %s293 = sshll.u32 %s203, 4
    %294 = dma.done %s106, %s293
    %v295 = vstv %s292
    %v296 = vadd.s32 %v295, %v207
    %s297 = sld [smem:[#allocation4 + %s78]]
    %s298 = sld [smem:[#allocation6 + %s78]]
    %s299 = sadd.s32 %s297, %s298
    %v300 = vstv %s297
    %vm301 = vcmp.le.s32.totalorder %v300, %v296
    %v302 = vstv %s299
    %vm303 = vcmp.lt.s32.totalorder %v296, %v302
    %vm304 = vmand %vm301, %vm303
    %s305 = sld [smem:[#allocation4 + %s98]]
    %s306 = sld [smem:[#allocation6 + %s98]]
    %s307 = sadd.s32 %s305, %s306
    %v308 = vstv %s305
    %vm309 = vcmp.le.s32.totalorder %v308, %v296
    %v310 = vstv %s307
    %vm311 = vcmp.lt.s32.totalorder %v296, %v310
    %vm312 = vmand %vm309, %vm311
    %vm313 = vmor %vm304, %vm312
    %v314 = vld [vmem:[%s105] sm:$0xff]
    %v315 = vsel %vm313, 1, 0
    %vm316 = vcmp.eq.s32.totalorder %v315, 1
    %v317 = vsel %vm316, 0.0, %v314
    %318 = vst [vmem:[%s105] sm:$0xff] %v317
    %s319 = sld [smem:[#allocation4 + %s119]]
    %p320 = scmp.lt.s32.totalorder %s319, 120
    %s321 = scalar_select %p320, %s319, 120
    %s322 = sshll.u32 %s203, 4
    %323 = dma.done %s127, %s322
    %v324 = vstv %s321
    %v325 = vadd.s32 %v324, %v207
    %s326 = sld [smem:[#allocation4 + %s119]]
    %s327 = sld [smem:[#allocation6 + %s119]]
    %s328 = sadd.s32 %s326, %s327
    %v329 = vstv %s326
    %vm330 = vcmp.le.s32.totalorder %v329, %v325
    %v331 = vstv %s328
    %vm332 = vcmp.lt.s32.totalorder %v325, %v331
    %vm333 = vmand %vm330, %vm332
    %s334 = sld [smem:[#allocation4 + %s139]]
    %s335 = sld [smem:[#allocation6 + %s139]]
    %s336 = sadd.s32 %s334, %s335
    %v337 = vstv %s334
    %vm338 = vcmp.le.s32.totalorder %v337, %v325
    %v339 = vstv %s336
    %vm340 = vcmp.lt.s32.totalorder %v325, %v339
    %vm341 = vmand %vm338, %vm340
    %vm342 = vmor %vm333, %vm341
    %v343 = vld [vmem:[%s126] sm:$0xff]
    %v344 = vsel %vm342, 1, 0
    %vm345 = vcmp.eq.s32.totalorder %v344, 1
    %v346 = vsel %vm345, 0.0, %v343
    %347 = vst [vmem:[%s126] sm:$0xff] %v346
    %s348 = sld [smem:[#allocation4 + %s139]]
    %p349 = scmp.lt.s32.totalorder %s348, 120
    %s350 = scalar_select %p349, %s348, 120
    %s351 = sshll.u32 %s203, 4
    %352 = dma.done %s147, %s351
    %v353 = vstv %s350
    %v354 = vadd.s32 %v353, %v207
    %s355 = sld [smem:[#allocation4 + %s119]]
    %s356 = sld [smem:[#allocation6 + %s119]]
    %s357 = sadd.s32 %s355, %s356
    %v358 = vstv %s355
    %vm359 = vcmp.le.s32.totalorder %v358, %v354
    %v360 = vstv %s357
    %vm361 = vcmp.lt.s32.totalorder %v354, %v360
    %vm362 = vmand %vm359, %vm361
    %s363 = sld [smem:[#allocation4 + %s139]]
    %s364 = sld [smem:[#allocation6 + %s139]]
    %s365 = sadd.s32 %s363, %s364
    %v366 = vstv %s363
    %vm367 = vcmp.le.s32.totalorder %v366, %v354
    %v368 = vstv %s365
    %vm369 = vcmp.lt.s32.totalorder %v354, %v368
    %vm370 = vmand %vm367, %vm369
    %vm371 = vmor %vm362, %vm370
    %v372 = vld [vmem:[%s146] sm:$0xff]
    %v373 = vsel %vm371, 1, 0
    %vm374 = vcmp.eq.s32.totalorder %v373, 1
    %v375 = vsel %vm374, 0.0, %v372
    %376 = vst [vmem:[%s146] sm:$0xff] %v375
    %s377 = sld [smem:[#allocation4 + %s160]]
    %p378 = scmp.lt.s32.totalorder %s377, 120
    %s379 = scalar_select %p378, %s377, 120
    %s380 = sshll.u32 %s203, 4
    %381 = dma.done %s168, %s380
    %v382 = vstv %s379
    %v383 = vadd.s32 %v382, %v207
    %s384 = sld [smem:[#allocation4 + %s160]]
    %s385 = sld [smem:[#allocation6 + %s160]]
    %s386 = sadd.s32 %s384, %s385
    %v387 = vstv %s384
    %vm388 = vcmp.le.s32.totalorder %v387, %v383
    %v389 = vstv %s386
    %vm390 = vcmp.lt.s32.totalorder %v383, %v389
    %vm391 = vmand %vm388, %vm390
    %s392 = sld [smem:[#allocation4 + %s180]]
    %s393 = sld [smem:[#allocation6 + %s180]]
    %s394 = sadd.s32 %s392, %s393
    %v395 = vstv %s392
    %vm396 = vcmp.le.s32.totalorder %v395, %v383
    %v397 = vstv %s394
    %vm398 = vcmp.lt.s32.totalorder %v383, %v397
    %vm399 = vmand %vm396, %vm398
    %vm400 = vmor %vm391, %vm399
    %v401 = vld [vmem:[%s167] sm:$0xff]
    %v402 = vsel %vm400, 1, 0
    %vm403 = vcmp.eq.s32.totalorder %v402, 1
    %v404 = vsel %vm403, 0.0, %v401
    %405 = vst [vmem:[%s167] sm:$0xff] %v404
    %s406 = sld [smem:[#allocation4 + %s180]]
    %p407 = scmp.lt.s32.totalorder %s406, 120
    %s408 = scalar_select %p407, %s406, 120
    %s409 = sshll.u32 %s203, 4
    %410 = dma.done %s188, %s409
    %v411 = vstv %s408
    %v412 = vadd.s32 %v411, %v207
    %s413 = sld [smem:[#allocation4 + %s160]]
    %s414 = sld [smem:[#allocation6 + %s160]]
    %s415 = sadd.s32 %s413, %s414
    %v416 = vstv %s413
    %vm417 = vcmp.le.s32.totalorder %v416, %v412
    %v418 = vstv %s415
    %vm419 = vcmp.lt.s32.totalorder %v412, %v418
    %vm420 = vmand %vm417, %vm419
    %s421 = sld [smem:[#allocation4 + %s180]]
    %s422 = sld [smem:[#allocation6 + %s180]]
    %s423 = sadd.s32 %s421, %s422
    %v424 = vstv %s421
    %vm425 = vcmp.le.s32.totalorder %v424, %v412
    %v426 = vstv %s423
    %vm427 = vcmp.lt.s32.totalorder %v412, %v426
    %vm428 = vmand %vm425, %vm427
    %vm429 = vmor %vm420, %vm428
    %v430 = vld [vmem:[%s187] sm:$0xff]
    %v431 = vsel %vm429, 1, 0
    %vm432 = vcmp.eq.s32.totalorder %v431, 1
    %v433 = vsel %vm432, 0.0, %v430
    %434 = vst [vmem:[%s187] sm:$0xff] %v433
    %s435 = sld [smem:[#allocation4 + %s38]]
    %p436 = scmp.lt.s32.totalorder %s435, 120
    %s437 = scalar_select %p436, %s435, 120
    %s438 = sadd.s32 %s42, %s437
    %s439 = smul.addr %s438, 16
    %s440 = scalar_lea.hbm %s3, %s439
    // Predicated region
    $region50: #{tpu_custom_call.1} parent=1 // pred_check
      _
    $region51: #{tpu_custom_call.1} parent=1 // pred_check_branch
      %442 = sbr.rel target = $region53
    $region52: #{tpu_custom_call.1} parent=1 // pred_region
      %443 = sst [smem:[#allocation10]] [#allocation27]
      %444 = sst [smem:[#allocation11]] [#allocation26]
    $region53: #{tpu_custom_call.1} parent=1 // pred_fallthru
      _
    %446 = shalt.err (0)
    %s448 = sshll.u32 [#allocation2], 4
    %s449 = int_to_ptr.vmem [resolvable:$true] %s448
    %451 = dma.vmem_to_hbm [thread:$0]  %s449, 128, %s440, [#allocation3]
    %s452 = sld [smem:[#allocation4 + %s57]]
    %p453 = scmp.lt.s32.totalorder %s452, 120
    %s454 = scalar_select %p453, %s452, 120
    %s455 = sadd.s32 %s42, %s454
    %s456 = smul.addr %s455, 16
    %s457 = scalar_lea.hbm %s3, %s456
    // Predicated region
    $region54: #{tpu_custom_call.1} parent=1 // pred_check
      _
    $region55: #{tpu_custom_call.1} parent=1 // pred_check_branch
      %459 = sbr.rel target = $region57
    $region56: #{tpu_custom_call.1} parent=1 // pred_region
      %460 = sst [smem:[#allocation10]] [#allocation29]
      %461 = sst [smem:[#allocation11]] [#allocation28]
    $region57: #{tpu_custom_call.1} parent=1 // pred_fallthru
      _
    %463 = shalt.err (0)
    %s465 = sshll.u32 %s64, 4
    %s466 = int_to_ptr.vmem [resolvable:$true] %s465
    %468 = dma.vmem_to_hbm [thread:$0]  %s466, 128, %s457, %s65
    %s469 = sld [smem:[#allocation4 + %s78]]
    %p470 = scmp.lt.s32.totalorder %s469, 120
    %s471 = scalar_select %p470, %s469, 120
    %s472 = sadd.s32 %s78, %s471
    %s473 = smul.addr %s472, 16
    %s474 = scalar_lea.hbm %s3, %s473
    // Predicated region
    $region58: #{tpu_custom_call.1} parent=1 // pred_check
      _
    $region59: #{tpu_custom_call.1} parent=1 // pred_check_branch
      %476 = sbr.rel target = $region61
    $region60: #{tpu_custom_call.1} parent=1 // pred_region
      %477 = sst [smem:[#allocation10]] [#allocation31]
      %478 = sst [smem:[#allocation11]] [#allocation30]
    $region61: #{tpu_custom_call.1} parent=1 // pred_fallthru
      _
    %480 = shalt.err (0)
    %s482 = sshll.u32 %s85, 4
    %s483 = int_to_ptr.vmem [resolvable:$true] %s482
    %485 = dma.vmem_to_hbm [thread:$0]  %s483, 128, %s474, %s86
    %s486 = sld [smem:[#allocation4 + %s98]]
    %p487 = scmp.lt.s32.totalorder %s486, 120
    %s488 = scalar_select %p487, %s486, 120
    %s489 = sadd.s32 %s78, %s488
    %s490 = smul.addr %s489, 16
    %s491 = scalar_lea.hbm %s3, %s490
    // Predicated region
    $region62: #{tpu_custom_call.1} parent=1 // pred_check
      _
    $region63: #{tpu_custom_call.1} parent=1 // pred_check_branch
      %493 = sbr.rel target = $region65
    $region64: #{tpu_custom_call.1} parent=1 // pred_region
      %494 = sst [smem:[#allocation10]] [#allocation33]
      %495 = sst [smem:[#allocation11]] [#allocation32]
    $region65: #{tpu_custom_call.1} parent=1 // pred_fallthru
      _
    %497 = shalt.err (0)
    %s499 = sshll.u32 %s105, 4
    %s500 = int_to_ptr.vmem [resolvable:$true] %s499
    %502 = dma.vmem_to_hbm [thread:$0]  %s500, 128, %s491, %s106
    %s503 = sld [smem:[#allocation4 + %s119]]
    %p504 = scmp.lt.s32.totalorder %s503, 120
    %s505 = scalar_select %p504, %s503, 120
    %s506 = sadd.s32 %s119, %s505
    %s507 = smul.addr %s506, 16
    %s508 = scalar_lea.hbm %s3, %s507
    // Predicated region
    $region66: #{tpu_custom_call.1} parent=1 // pred_check
      _
    $region67: #{tpu_custom_call.1} parent=1 // pred_check_branch
      %510 = sbr.rel target = $region69
    $region68: #{tpu_custom_call.1} parent=1 // pred_region
      %511 = sst [smem:[#allocation10]] [#allocation35]
      %512 = sst [smem:[#allocation11]] [#allocation34]
    $region69: #{tpu_custom_call.1} parent=1 // pred_fallthru
      _
    %514 = shalt.err (0)
    %s516 = sshll.u32 %s126, 4
    %s517 = int_to_ptr.vmem [resolvable:$true] %s516
    %519 = dma.vmem_to_hbm [thread:$0]  %s517, 128, %s508, %s127
    %s520 = sld [smem:[#allocation4 + %s139]]
    %p521 = scmp.lt.s32.totalorder %s520, 120
    %s522 = scalar_select %p521, %s520, 120
    %s523 = sadd.s32 %s119, %s522
    %s524 = smul.addr %s523, 16
    %s525 = scalar_lea.hbm %s3, %s524
    // Predicated region
    $region70: #{tpu_custom_call.1} parent=1 // pred_check
      _
    $region71: #{tpu_custom_call.1} parent=1 // pred_check_branch
      %527 = sbr.rel target = $region73
    $region72: #{tpu_custom_call.1} parent=1 // pred_region
      %528 = sst [smem:[#allocation10]] [#allocation37]
      %529 = sst [smem:[#allocation11]] [#allocation36]
    $region73: #{tpu_custom_call.1} parent=1 // pred_fallthru
      _
    %531 = shalt.err (0)
    %s533 = sshll.u32 %s146, 4
    %s534 = int_to_ptr.vmem [resolvable:$true] %s533
    %536 = dma.vmem_to_hbm [thread:$0]  %s534, 128, %s525, %s147
    %s537 = sld [smem:[#allocation4 + %s160]]
    %p538 = scmp.lt.s32.totalorder %s537, 120
    %s539 = scalar_select %p538, %s537, 120
    %s540 = sadd.s32 %s160, %s539
    %s541 = smul.addr %s540, 16
    %s542 = scalar_lea.hbm %s3, %s541
    // Predicated region
    $region74: #{tpu_custom_call.1} parent=1 // pred_check
      _
    $region75: #{tpu_custom_call.1} parent=1 // pred_check_branch
      %544 = sbr.rel target = $region77
    $region76: #{tpu_custom_call.1} parent=1 // pred_region
      %545 = sst [smem:[#allocation10]] [#allocation39]
      %546 = sst [smem:[#allocation11]] [#allocation38]
    $region77: #{tpu_custom_call.1} parent=1 // pred_fallthru
      _
    %548 = shalt.err (0)
    %s550 = sshll.u32 %s167, 4
    %s551 = int_to_ptr.vmem [resolvable:$true] %s550
    %553 = dma.vmem_to_hbm [thread:$0]  %s551, 128, %s542, %s168
    %s554 = sld [smem:[#allocation4 + %s180]]
    %p555 = scmp.lt.s32.totalorder %s554, 120
    %s556 = scalar_select %p555, %s554, 120
    %s557 = sadd.s32 %s160, %s556
    %s558 = smul.addr %s557, 16
    %s559 = scalar_lea.hbm %s3, %s558
    // Predicated region
    $region78: #{tpu_custom_call.1} parent=1 // pred_check
      _
    $region79: #{tpu_custom_call.1} parent=1 // pred_check_branch
      %561 = sbr.rel target = $region81
    $region80: #{tpu_custom_call.1} parent=1 // pred_region
      %562 = sst [smem:[#allocation10]] [#allocation41]
      %563 = sst [smem:[#allocation11]] [#allocation40]
    $region81: #{tpu_custom_call.1} parent=1 // pred_fallthru
      _
    %565 = shalt.err (0)
    %s567 = sshll.u32 %s187, 4
    %s568 = int_to_ptr.vmem [resolvable:$true] %s567
    %570 = dma.vmem_to_hbm [thread:$0]  %s568, 128, %s559, %s188
    %s571 = sld [smem:[#allocation4 + %s38]]
    %s572 = sshll.u32 %s203, 4
    %573 = dma.done [#allocation3], %s572
    %s574 = sld [smem:[#allocation4 + %s57]]
    %s575 = sshll.u32 %s203, 4
    %576 = dma.done %s65, %s575
    %s577 = sld [smem:[#allocation4 + %s78]]
    %s578 = sshll.u32 %s203, 4
    %579 = dma.done %s86, %s578
    %s580 = sld [smem:[#allocation4 + %s98]]
    %s581 = sshll.u32 %s203, 4
    %582 = dma.done %s106, %s581
    %s583 = sld [smem:[#allocation4 + %s119]]
    %s584 = sshll.u32 %s203, 4
    %585 = dma.done %s127, %s584
    %s586 = sld [smem:[#allocation4 + %s139]]
    %s587 = sshll.u32 %s203, 4
    %588 = dma.done %s147, %s587
    %s589 = sld [smem:[#allocation4 + %s160]]
    %s590 = sshll.u32 %s203, 4
    %591 = dma.done %s168, %s590
    %s592 = sld [smem:[#allocation4 + %s180]]
    %s593 = sshll.u32 %s203, 4
    %594 = dma.done %s188, %s593
    %595 = vsyncpa [#allocation5], 1
    %596 = vsyncpa [#allocation7], 1
  %597 = vsyncmov [#allocation3]
  %s598 = vpop.sfrf %597
  %p599 = scmp.eq.s32.totalorder %s598, 0
  %p600 = pneg %p599
  %602 = shalt.err (%p600)
  %s603 = scalar_lea.sflag [#allocation3], 1
  %604 = vsyncmov %s603
  %s605 = vpop.sfrf %604
  %p606 = scmp.eq.s32.totalorder %s605, 0
  %p607 = pneg %p606
  %609 = shalt.err (%p607)
  %s610 = scalar_lea.sflag [#allocation3], 2
  %611 = vsyncmov %s610
  %s612 = vpop.sfrf %611
  %p613 = scmp.eq.s32.totalorder %s612, 0
  %p614 = pneg %p613
  %616 = shalt.err (%p614)
  %s617 = scalar_lea.sflag [#allocation3], 3
  %618 = vsyncmov %s617
  %s619 = vpop.sfrf %618
  %p620 = scmp.eq.s32.totalorder %s619, 0
  %p621 = pneg %p620
  %623 = shalt.err (%p621)
  %s624 = scalar_lea.sflag [#allocation3], 4
  %625 = vsyncmov %s624
  %s626 = vpop.sfrf %625
  %p627 = scmp.eq.s32.totalorder %s626, 0
  %p628 = pneg %p627
  %630 = shalt.err (%p628)
  %s631 = scalar_lea.sflag [#allocation3], 5
  %632 = vsyncmov %s631
  %s633 = vpop.sfrf %632
  %p634 = scmp.eq.s32.totalorder %s633, 0
  %p635 = pneg %p634
  %637 = shalt.err (%p635)
  %s638 = scalar_lea.sflag [#allocation3], 6
  %639 = vsyncmov %s638
  %s640 = vpop.sfrf %639
  %p641 = scmp.eq.s32.totalorder %s640, 0
  %p642 = pneg %p641
  %644 = shalt.err (%p642)
  %s645 = scalar_lea.sflag [#allocation3], 7
  %646 = vsyncmov %s645
  %s647 = vpop.sfrf %646
  %p648 = scmp.eq.s32.totalorder %s647, 0
  %p649 = pneg %p648
  %651 = shalt.err (%p649)

</llo_original>
